<compile_context>
chip_gen: v7x
topology: tpu7x:2x2x1
jax: 0.10.0
libtpu: 0.0.40
codegen_flags: <defaults>
</compile_context>

<pallas_src>
import jax
import jax.numpy as jnp
from jax import lax
from jax.experimental import pallas as pl
from jax.experimental.pallas import tpu as pltpu

_EPS = 1e-5


# ----------------------------------------------------------------------------
# Pass 1: LayerNorm -> fused pointwise conv (D -> 2C) -> GLU -> depthwise conv.
# Emits the depthwise output (bf16) and per-tile BatchNorm partial statistics.
# ----------------------------------------------------------------------------
def _conv_pre_kernel(x_ref, xl_ref, xr_ref, ln_g_ref, ln_b_ref, w1_ref, wdw_ref,
                     dw_ref, stats_ref, win_ref):
    TQ, D = x_ref.shape
    H = xl_ref.shape[0]
    K = wdw_ref.shape[0]
    C = dw_ref.shape[-1]
    pad = (K - 1) // 2

    t_idx = pl.program_id(1)
    n_t = pl.num_programs(1)

    # Hoisted parameter loads (shared by main tile + halos).
    ln_g = ln_g_ref[...]                                     # (1, D)
    ln_b = ln_b_ref[...]                                     # (1, D)
    w1 = w1_ref[...]                                         # (D, 2C) bf16

    def ln_pw_glu(x_raw):
        # LayerNorm over D (biased variance, eps=1e-5) in f32.
        x = x_raw.astype(jnp.float32)
        mu = jnp.mean(x, axis=-1, keepdims=True)
        var = jnp.mean((x - mu) ** 2, axis=-1, keepdims=True)
        xn = (x - mu) * lax.rsqrt(var + _EPS)
        xn = xn * ln_g + ln_b
        # Fused pointwise Conv1d(D -> 2C): one MXU matmul, f32 accumulation.
        y = jnp.dot(xn.astype(jnp.bfloat16), w1,
                    preferred_element_type=jnp.float32)      # (rows, 2C)
        return y[:, :C] * jax.nn.sigmoid(y[:, C:])           # GLU, f32

    # SAME-padding zeros at the sequence boundaries: mask invalid halos.
    left_valid = (t_idx > 0).astype(jnp.float32)
    right_valid = (t_idx < n_t - 1).astype(jnp.float32)

    # Fill the sliding-window scratch: [left halo | main TQ rows | right halo].
    win_ref[0:H, :] = ln_pw_glu(xl_ref[...]) * left_valid
    win_ref[H:H + TQ, :] = ln_pw_glu(x_ref[...])
    win_ref[H + TQ:H + TQ + H, :] = ln_pw_glu(xr_ref[...]) * right_valid

    # Depthwise Conv1d(C, C, K, groups=C, 'SAME'): K shifted VPU multiply-adds
    # over static slices of the scratch window (no concat, no zero-init).
    taps = wdw_ref[...]                                      # (K, 1, C)
    base = H - pad
    acc = win_ref[base:base + TQ, :] * taps[0]
    for k in range(1, K):                                    # K is small & static
        acc = acc + win_ref[base + k:base + k + TQ, :] * taps[k]

    dw_ref[...] = acc.astype(dw_ref.dtype)                   # bf16 to HBM

    # BatchNorm partial statistics for this (batch, time-tile), from f32 acc.
    stats_ref[0:1, :] = jnp.sum(acc, axis=0, keepdims=True)
    stats_ref[1:2, :] = jnp.sum(acc * acc, axis=0, keepdims=True)


# ----------------------------------------------------------------------------
# Pass 2: folded BatchNorm (scale/shift) -> SiLU -> pointwise conv (C -> D).
# ----------------------------------------------------------------------------
def _conv_post_kernel(dw_ref, scale_ref, shift_ref, w2_ref, o_ref):
    h = dw_ref[...].astype(jnp.float32)                      # (TQ, C)
    bn = h * scale_ref[...] + shift_ref[...]                 # folded BatchNorm
    s = bn * jax.nn.sigmoid(bn)                              # SiLU, f32
    # pointwise Conv1d(C -> D, k=1, no bias); Dropout(p=0.0) == identity.
    out = jnp.dot(s.astype(jnp.bfloat16), w2_ref[...],
                  preferred_element_type=jnp.float32)        # (TQ, D)
    o_ref[...] = out.astype(o_ref.dtype)


def _choose_time_tile(T, H, tq):
    """Largest multiple of H that divides T and is <= tq; falls back to T."""
    best = None
    d = H
    limit = min(tq, T)
    while d <= limit:
        if T % d == 0:
            best = d
        d += H
    return best if best is not None else T


def conv_module_forward(x, params, tq=256):
    """Pallas wrapper. x: (B, T, D) float32."""
    ln_g, ln_b, w1, wdw, bn_g, bn_b, w2 = params
    B, T, D = x.shape
    K = wdw.shape[0]
    C = w2.shape[0]
    pad = (K - 1) // 2
    H = max(8, ((pad + 7) // 8) * 8)          # sublane-aligned halo rows
    assert T >= H, "sequence too short for halo blocks"

    TQ = _choose_time_tile(T, H, tq)          # time tile; TQ == T is the fallback
    n_t = T // TQ
    R = TQ // H                               # halo blocks per time tile
    n_hb = max(T // H, 1)                     # number of halo-sized blocks in T

    # Pre-cast MXU weights to bf16 once in the wrapper.
    w1_bf = w1.astype(jnp.bfloat16)           # (D, 2C)
    w2_bf = w2.astype(jnp.bfloat16)           # (C, D)

    parallel = pltpu.CompilerParams(
        dimension_semantics=("parallel", "parallel"))

    # Halo index maps (element rows [t*TQ - H, t*TQ) and [(t+1)*TQ, +H)),
    # clamped at the boundaries; the kernel masks boundary halos to zero.
    def x_map(b, t):
        return (b, t, 0)

    def xl_map(b, t):
        return (b, jnp.maximum(t * R - 1, 0), 0)

    def xr_map(b, t):
        return (b, jnp.minimum((t + 1) * R, n_hb - 1), 0)

    cost1 = pl.CostEstimate(
        flops=int(4 * B * T * D * C + 2 * B * T * C * K + 8 * B * T * D),
        transcendentals=int(B * T * (C + 1)),
        bytes_accessed=int(4 * B * T * D + 2 * B * T * C
                           + 4 * B * n_t * 2 * C + 2 * D * 2 * C + 4 * K * C),
    )

    # ---- pass 1: grid over (batch, time tiles) ----
    dw, stats = pl.pallas_call(
        _conv_pre_kernel,
        out_shape=(jax.ShapeDtypeStruct((B, T, C), jnp.bfloat16),
                   jax.ShapeDtypeStruct((B, n_t, 2, C), jnp.float32)),
        grid=(B, n_t),
        in_specs=[
            pl.BlockSpec((None, TQ, D), x_map),               # main x tile
            pl.BlockSpec((None, H, D), xl_map),               # left halo rows
            pl.BlockSpec((None, H, D), xr_map),               # right halo rows
            pl.BlockSpec((1, D), lambda b, t: (0, 0)),        # ln gamma
            pl.BlockSpec((1, D), lambda b, t: (0, 0)),        # ln beta
            pl.BlockSpec((D, 2 * C), lambda b, t: (0, 0)),    # fused w1 (bf16)
            pl.BlockSpec((K, 1, C), lambda b, t: (0, 0, 0)),  # depthwise taps
        ],
        out_specs=(
            pl.BlockSpec((None, TQ, C), lambda b, t: (b, t, 0)),       # dw (bf16)
            pl.BlockSpec((None, None, 2, C), lambda b, t: (b, t, 0, 0)),  # stats
        ),
        scratch_shapes=[pltpu.VMEM((TQ + 2 * H, C), jnp.float32)],
        compiler_params=parallel,
        cost_estimate=cost1,
    )(x, x, x, ln_g, ln_b, w1_bf, wdw)

    # ---- tiny JAX combine: global training-mode BN stats, folded to scale/shift ----
    n = jnp.float32(B * T)
    ssum = jnp.sum(stats[:, :, 0, :], axis=(0, 1))            # (C,)
    ssq = jnp.sum(stats[:, :, 1, :], axis=(0, 1))             # (C,)
    bmu = ssum / n
    bvar = jnp.maximum(ssq / n - bmu * bmu, 0.0)               # biased variance
    inv = lax.rsqrt(bvar + _EPS)
    g = bn_g.reshape(C)
    scale = (g * inv).reshape(1, C)
    shift = (bn_b.reshape(C) - bmu * g * inv).reshape(1, C)

    cost2 = pl.CostEstimate(
        flops=int(2 * B * T * C * D + 6 * B * T * C),
        transcendentals=int(B * T * C),
        bytes_accessed=int(2 * B * T * C + 4 * B * T * D + 2 * C * D),
    )

    # ---- pass 2: folded BN -> SiLU -> second pointwise conv ----
    out = pl.pallas_call(
        _conv_post_kernel,
        out_shape=jax.ShapeDtypeStruct((B, T, D), x.dtype),
        grid=(B, n_t),
        in_specs=[
            pl.BlockSpec((None, TQ, C), lambda b, t: (b, t, 0)),  # dw tile (bf16)
            pl.BlockSpec((1, C), lambda b, t: (0, 0)),            # BN scale
            pl.BlockSpec((1, C), lambda b, t: (0, 0)),            # BN shift
            pl.BlockSpec((C, D), lambda b, t: (0, 0)),            # w2 (bf16)
        ],
        out_specs=pl.BlockSpec((None, TQ, D), lambda b, t: (b, t, 0)),
        compiler_params=parallel,
        cost_estimate=cost2,
    )(dw, scale, shift, w2_bf)
    return out


def init_params(key, input_dim, num_channels, kernel_size):
    """Deterministic synthetic parameters (shapes match the PyTorch module)."""
    D, C, K = input_dim, num_channels, kernel_size
    assert (K - 1) % 2 == 0, "depthwise_kernel_size must be odd"
    k1, k2, k3 = jax.random.split(key, 3)
    s1 = 1.0 / (D ** 0.5)
    w1 = jax.random.uniform(k1, (D, 2 * C), jnp.float32, -s1, s1)    # Conv1d(D,2C,1) as (in,out)
    sdw = 1.0 / (K ** 0.5)
    wdw = jax.random.uniform(k2, (K, 1, C), jnp.float32, -sdw, sdw)  # depthwise taps
    s2 = 1.0 / (C ** 0.5)
    w2 = jax.random.uniform(k3, (C, D), jnp.float32, -s2, s2)        # Conv1d(C,D,1) as (in,out)
    ln_g = jnp.ones((1, D), jnp.float32)
    ln_b = jnp.zeros((1, D), jnp.float32)
    bn_g = jnp.ones((1, C), jnp.float32)
    bn_b = jnp.zeros((1, C), jnp.float32)
    return (ln_g, ln_b, w1, wdw, bn_g, bn_b, w2)


def reference_forward(x, params):
    """Pure-JAX reference mirroring the PyTorch forward (sanity check)."""
    ln_g, ln_b, w1, wdw, bn_g, bn_b, w2 = params
    B, T, D = x.shape
    K = wdw.shape[0]
    C = w2.shape[0]
    eps = 1e-5
    hi = lax.Precision.HIGHEST
    mu = x.mean(-1, keepdims=True)
    var = ((x - mu) ** 2).mean(-1, keepdims=True)
    xn = (x - mu) / jnp.sqrt(var + eps) * ln_g.reshape(1, 1, D) + ln_b.reshape(1, 1, D)
    y = jnp.einsum("btd,dc->btc", xn, w1, precision=hi,
                   preferred_element_type=jnp.float32)
    a, g = y[..., :C], y[..., C:]
    glu = a * jax.nn.sigmoid(g)
    pad = (K - 1) // 2
    glu_p = jnp.pad(glu, ((0, 0), (pad, pad), (0, 0)))
    dw = sum(glu_p[:, k:k + T, :] * wdw[k][None] for k in range(K))
    flat = dw.reshape(B * T, C)
    bmu = flat.mean(0, keepdims=True)
    bvar = ((flat - bmu) ** 2).mean(0, keepdims=True)
    bn = (flat - bmu) / jnp.sqrt(bvar + eps) * bn_g + bn_b
    s = bn * jax.nn.sigmoid(bn)
    out = jnp.dot(s, w2, precision=hi, preferred_element_type=jnp.float32)
    return out.reshape(B, T, D)


if __name__ == "__main__":
    # Small shapes consistent with the module: input_dim=D, num_channels=C, K odd.
    # tq=64 forces two time tiles so the halo/tiling path is exercised.
    B, T, D, C, K = 2, 128, 64, 32, 7
    key = jax.random.PRNGKey(0)
    kx, kp = jax.random.split(key)
    x = jax.random.normal(kx, (B, T, D), jnp.float32)
    params = init_params(kp, D, C, K)

    out = jax.block_until_ready(conv_module_forward(x, params, tq=64))
    assert out.shape == (B, T, D)

    # bf16 MXU operands + bf16 inter-pass storage (f32 accumulation) vs an f32
    # HIGHEST-precision reference: relaxed tolerance documents that trade.
    ref = reference_forward(x, params)
    if not jnp.allclose(out, ref, atol=5e-2, rtol=5e-2):
        err = jnp.max(jnp.abs(out - ref))
        raise AssertionError(f"Pallas kernel output mismatch vs reference (max abs err {err})")
    print("KERNEL_OK")
</pallas_src>

<mosaic_0001>
module attributes {stable_mosaic.version = 11 : i64} {
  func.func @_conv_pre_kernel(%arg0: i32, %arg1: i32, %arg2: memref<1x64x64xf32, #tpu.memory_space<vmem>>, %arg3: memref<1x8x64xf32, #tpu.memory_space<vmem>>, %arg4: memref<1x8x64xf32, #tpu.memory_space<vmem>>, %arg5: memref<1x64xf32, #tpu.memory_space<vmem>>, %arg6: memref<1x64xf32, #tpu.memory_space<vmem>>, %arg7: memref<64x64xbf16, #tpu.memory_space<vmem>>, %arg8: memref<7x1x32xf32, #tpu.memory_space<vmem>>, %arg9: memref<1x64x32xbf16, #tpu.memory_space<vmem>>, %arg10: memref<1x1x2x32xf32, #tpu.memory_space<vmem>>, %arg11: memref<80x32xf32, #tpu.memory_space<vmem>>) attributes {dimension_semantics = [#tpu.dimension_semantics<parallel>, #tpu.dimension_semantics<parallel>], iteration_bounds = array<i64: 2, 2>, scalar_prefetch = 0 : i64, scratch_operands = 1 : i64, tpu.core_type = #tpu.core_type<tc>, window_params = [{transform_indices = @transform_0, window_bounds = array<i64: 1, 64, 64>}, {transform_indices = @transform_1, window_bounds = array<i64: 1, 8, 64>}, {transform_indices = @transform_2, window_bounds = array<i64: 1, 8, 64>}, {pipeline_mode = #tpu.pipeline_mode<synchronous>, transform_indices = @transform_3, window_bounds = array<i64: 1, 64>}, {pipeline_mode = #tpu.pipeline_mode<synchronous>, transform_indices = @transform_4, window_bounds = array<i64: 1, 64>}, {pipeline_mode = #tpu.pipeline_mode<synchronous>, transform_indices = @transform_5, window_bounds = array<i64: 64, 64>}, {pipeline_mode = #tpu.pipeline_mode<synchronous>, transform_indices = @transform_6, window_bounds = array<i64: 7, 1, 32>}, {transform_indices = @transform_7, window_bounds = array<i64: 1, 64, 32>}, {transform_indices = @transform_8, window_bounds = array<i64: 1, 1, 2, 32>}]} {
    %c0 = arith.constant 0 : index
    %c0_0 = arith.constant 0 : index
    %0 = vector.load %arg5[%c0, %c0_0] : memref<1x64xf32, #tpu.memory_space<vmem>>, vector<1x64xf32>
    %c0_1 = arith.constant 0 : index
    %c0_2 = arith.constant 0 : index
    %1 = vector.load %arg6[%c0_1, %c0_2] : memref<1x64xf32, #tpu.memory_space<vmem>>, vector<1x64xf32>
    %c0_3 = arith.constant 0 : index
    %c0_4 = arith.constant 0 : index
    %2 = vector.load %arg7[%c0_3, %c0_4] : memref<64x64xbf16, #tpu.memory_space<vmem>>, vector<64x64xbf16>
    %c0_i32 = arith.constant 0 : i32
    %3 = arith.cmpi sgt, %arg1, %c0_i32 : i32
    %4 = arith.extui %3 : i1 to i32
    %5 = arith.sitofp %4 : i32 to f32
    %c1_i32 = arith.constant 1 : i32
    %6 = arith.cmpi slt, %arg1, %c1_i32 : i32
    %7 = arith.extui %6 : i1 to i32
    %8 = arith.sitofp %7 : i32 to f32
    %c0_5 = arith.constant 0 : index
    %c0_6 = arith.constant 0 : index
    %c0_7 = arith.constant 0 : index
    %9 = vector.load %arg3[%c0_5, %c0_6, %c0_7] : memref<1x8x64xf32, #tpu.memory_space<vmem>>, vector<1x8x64xf32>
    %10 = vector.shape_cast %9 : vector<1x8x64xf32> to vector<8x64xf32>
    %cst = arith.constant dense<0.000000e+00> : vector<8xf32>
    %11 = vector.multi_reduction <add>, %10, %cst [1] : vector<8x64xf32> to vector<8xf32>
    %12 = vector.shape_cast %11 : vector<8xf32> to vector<8x1xf32>
    %cst_8 = arith.constant 6.400000e+01 : f32
    %13 = vector.broadcast %cst_8 : f32 to vector<8x1xf32>
    %14 = arith.divf %12, %13 : vector<8x1xf32>
    %15 = vector.broadcast %14 : vector<8x1xf32> to vector<8x64xf32>
    %16 = arith.subf %10, %15 : vector<8x64xf32>
    %17 = arith.mulf %16, %16 : vector<8x64xf32>
    %cst_9 = arith.constant dense<0.000000e+00> : vector<8xf32>
    %18 = vector.multi_reduction <add>, %17, %cst_9 [1] : vector<8x64xf32> to vector<8xf32>
    %19 = vector.shape_cast %18 : vector<8xf32> to vector<8x1xf32>
    %cst_10 = arith.constant 6.400000e+01 : f32
    %20 = vector.broadcast %cst_10 : f32 to vector<8x1xf32>
    %21 = arith.divf %19, %20 : vector<8x1xf32>
    %22 = vector.broadcast %14 : vector<8x1xf32> to vector<8x64xf32>
    %23 = arith.subf %10, %22 : vector<8x64xf32>
    %cst_11 = arith.constant 9.99999974E-6 : f32
    %24 = vector.broadcast %cst_11 : f32 to vector<8x1xf32>
    %25 = arith.addf %21, %24 : vector<8x1xf32>
    %26 = math.rsqrt %25 : vector<8x1xf32>
    %27 = vector.broadcast %26 : vector<8x1xf32> to vector<8x64xf32>
    %28 = arith.mulf %23, %27 : vector<8x64xf32>
    %29 = vector.broadcast %0 : vector<1x64xf32> to vector<8x64xf32>
    %30 = arith.mulf %28, %29 : vector<8x64xf32>
    %31 = vector.broadcast %1 : vector<1x64xf32> to vector<8x64xf32>
    %32 = arith.addf %30, %31 : vector<8x64xf32>
    %33 = arith.truncf %32 : vector<8x64xf32> to vector<8x64xbf16>
    %cst_12 = arith.constant dense<0.000000e+00> : vector<8x64xf32>
    %34 = tpu.matmul %33, %2, %cst_12 {dimension_numbers = #tpu.dot_dimension_numbers<[1], [0], [0], [1], [0, 0, 1, 1], [], []>} : vector<8x64xbf16>, vector<64x64xbf16>, vector<8x64xf32> -> vector<8x64xf32>
    %35 = vector.extract_strided_slice %34 {offsets = [0, 0], sizes = [8, 32], strides = [1, 1]} : vector<8x64xf32> to vector<8x32xf32>
    %36 = vector.extract_strided_slice %34 {offsets = [0, 32], sizes = [8, 32], strides = [1, 1]} : vector<8x64xf32> to vector<8x32xf32>
    %37 = arith.negf %36 : vector<8x32xf32>
    %38 = math.exp %37 : vector<8x32xf32>
    %cst_13 = arith.constant 1.000000e+00 : f32
    %39 = vector.broadcast %cst_13 : f32 to vector<8x32xf32>
    %40 = arith.addf %39, %38 : vector<8x32xf32>
    %41 = arith.divf %39, %40 : vector<8x32xf32>
    %42 = arith.mulf %35, %41 : vector<8x32xf32>
    %43 = vector.broadcast %5 : f32 to vector<8x32xf32>
    %44 = arith.mulf %42, %43 : vector<8x32xf32>
    %c0_14 = arith.constant 0 : index
    %c0_15 = arith.constant 0 : index
    %45 = vector.load %arg11[%c0_14, %c0_15] : memref<80x32xf32, #tpu.memory_space<vmem>>, vector<8x32xf32>
    tpu.vector_store %arg11[%c0_14, %c0_15], %44 {strides = array<i32>} : memref<80x32xf32, #tpu.memory_space<vmem>>, vector<8x32xf32>,
    %c0_16 = arith.constant 0 : index
    %c0_17 = arith.constant 0 : index
    %c0_18 = arith.constant 0 : index
    %46 = vector.load %arg2[%c0_16, %c0_17, %c0_18] : memref<1x64x64xf32, #tpu.memory_space<vmem>>, vector<1x64x64xf32>
    %47 = vector.shape_cast %46 : vector<1x64x64xf32> to vector<64x64xf32>
    %cst_19 = arith.constant dense<0.000000e+00> : vector<64xf32>
    %48 = vector.multi_reduction <add>, %47, %cst_19 [1] : vector<64x64xf32> to vector<64xf32>
    %49 = vector.shape_cast %48 : vector<64xf32> to vector<64x1xf32>
    %cst_20 = arith.constant 6.400000e+01 : f32
    %50 = vector.broadcast %cst_20 : f32 to vector<64x1xf32>
    %51 = arith.divf %49, %50 : vector<64x1xf32>
    %52 = vector.broadcast %51 : vector<64x1xf32> to vector<64x64xf32>
    %53 = arith.subf %47, %52 : vector<64x64xf32>
    %54 = arith.mulf %53, %53 : vector<64x64xf32>
    %cst_21 = arith.constant dense<0.000000e+00> : vector<64xf32>
    %55 = vector.multi_reduction <add>, %54, %cst_21 [1] : vector<64x64xf32> to vector<64xf32>
    %56 = vector.shape_cast %55 : vector<64xf32> to vector<64x1xf32>
    %cst_22 = arith.constant 6.400000e+01 : f32
    %57 = vector.broadcast %cst_22 : f32 to vector<64x1xf32>
    %58 = arith.divf %56, %57 : vector<64x1xf32>
    %59 = vector.broadcast %51 : vector<64x1xf32> to vector<64x64xf32>
    %60 = arith.subf %47, %59 : vector<64x64xf32>
    %cst_23 = arith.constant 9.99999974E-6 : f32
    %61 = vector.broadcast %cst_23 : f32 to vector<64x1xf32>
    %62 = arith.addf %58, %61 : vector<64x1xf32>
    %63 = math.rsqrt %62 : vector<64x1xf32>
    %64 = vector.broadcast %63 : vector<64x1xf32> to vector<64x64xf32>
    %65 = arith.mulf %60, %64 : vector<64x64xf32>
    %66 = vector.broadcast %0 : vector<1x64xf32> to vector<64x64xf32>
    %67 = arith.mulf %65, %66 : vector<64x64xf32>
    %68 = vector.broadcast %1 : vector<1x64xf32> to vector<64x64xf32>
    %69 = arith.addf %67, %68 : vector<64x64xf32>
    %70 = arith.truncf %69 : vector<64x64xf32> to vector<64x64xbf16>
    %cst_24 = arith.constant dense<0.000000e+00> : vector<64x64xf32>
    %71 = tpu.matmul %70, %2, %cst_24 {dimension_numbers = #tpu.dot_dimension_numbers<[1], [0], [0], [1], [0, 0, 1, 1], [], []>} : vector<64x64xbf16>, vector<64x64xbf16>, vector<64x64xf32> -> vector<64x64xf32>
    %72 = vector.extract_strided_slice %71 {offsets = [0, 0], sizes = [64, 32], strides = [1, 1]} : vector<64x64xf32> to vector<64x32xf32>
    %73 = vector.extract_strided_slice %71 {offsets = [0, 32], sizes = [64, 32], strides = [1, 1]} : vector<64x64xf32> to vector<64x32xf32>
    %74 = arith.negf %73 : vector<64x32xf32>
    %75 = math.exp %74 : vector<64x32xf32>
    %cst_25 = arith.constant 1.000000e+00 : f32
    %76 = vector.broadcast %cst_25 : f32 to vector<64x32xf32>
    %77 = arith.addf %76, %75 : vector<64x32xf32>
    %78 = arith.divf %76, %77 : vector<64x32xf32>
    %79 = arith.mulf %72, %78 : vector<64x32xf32>
    %c8 = arith.constant 8 : index
    %c0_26 = arith.constant 0 : index
    %80 = vector.load %arg11[%c8, %c0_26] : memref<80x32xf32, #tpu.memory_space<vmem>>, vector<64x32xf32>
    tpu.vector_store %arg11[%c8, %c0_26], %79 {strides = array<i32>} : memref<80x32xf32, #tpu.memory_space<vmem>>, vector<64x32xf32>,
    %c0_27 = arith.constant 0 : index
    %c0_28 = arith.constant 0 : index
    %c0_29 = arith.constant 0 : index
    %81 = vector.load %arg4[%c0_27, %c0_28, %c0_29] : memref<1x8x64xf32, #tpu.memory_space<vmem>>, vector<1x8x64xf32>
    %82 = vector.shape_cast %81 : vector<1x8x64xf32> to vector<8x64xf32>
    %cst_30 = arith.constant dense<0.000000e+00> : vector<8xf32>
    %83 = vector.multi_reduction <add>, %82, %cst_30 [1] : vector<8x64xf32> to vector<8xf32>
    %84 = vector.shape_cast %83 : vector<8xf32> to vector<8x1xf32>
    %cst_31 = arith.constant 6.400000e+01 : f32
    %85 = vector.broadcast %cst_31 : f32 to vector<8x1xf32>
    %86 = arith.divf %84, %85 : vector<8x1xf32>
    %87 = vector.broadcast %86 : vector<8x1xf32> to vector<8x64xf32>
    %88 = arith.subf %82, %87 : vector<8x64xf32>
    %89 = arith.mulf %88, %88 : vector<8x64xf32>
    %cst_32 = arith.constant dense<0.000000e+00> : vector<8xf32>
    %90 = vector.multi_reduction <add>, %89, %cst_32 [1] : vector<8x64xf32> to vector<8xf32>
    %91 = vector.shape_cast %90 : vector<8xf32> to vector<8x1xf32>
    %cst_33 = arith.constant 6.400000e+01 : f32
    %92 = vector.broadcast %cst_33 : f32 to vector<8x1xf32>
    %93 = arith.divf %91, %92 : vector<8x1xf32>
    %94 = vector.broadcast %86 : vector<8x1xf32> to vector<8x64xf32>
    %95 = arith.subf %82, %94 : vector<8x64xf32>
    %cst_34 = arith.constant 9.99999974E-6 : f32
    %96 = vector.broadcast %cst_34 : f32 to vector<8x1xf32>
    %97 = arith.addf %93, %96 : vector<8x1xf32>
    %98 = math.rsqrt %97 : vector<8x1xf32>
    %99 = vector.broadcast %98 : vector<8x1xf32> to vector<8x64xf32>
    %100 = arith.mulf %95, %99 : vector<8x64xf32>
    %101 = vector.broadcast %0 : vector<1x64xf32> to vector<8x64xf32>
    %102 = arith.mulf %100, %101 : vector<8x64xf32>
    %103 = vector.broadcast %1 : vector<1x64xf32> to vector<8x64xf32>
    %104 = arith.addf %102, %103 : vector<8x64xf32>
    %105 = arith.truncf %104 : vector<8x64xf32> to vector<8x64xbf16>
    %cst_35 = arith.constant dense<0.000000e+00> : vector<8x64xf32>
    %106 = tpu.matmul %105, %2, %cst_35 {dimension_numbers = #tpu.dot_dimension_numbers<[1], [0], [0], [1], [0, 0, 1, 1], [], []>} : vector<8x64xbf16>, vector<64x64xbf16>, vector<8x64xf32> -> vector<8x64xf32>
    %107 = vector.extract_strided_slice %106 {offsets = [0, 0], sizes = [8, 32], strides = [1, 1]} : vector<8x64xf32> to vector<8x32xf32>
    %108 = vector.extract_strided_slice %106 {offsets = [0, 32], sizes = [8, 32], strides = [1, 1]} : vector<8x64xf32> to vector<8x32xf32>
    %109 = arith.negf %108 : vector<8x32xf32>
    %110 = math.exp %109 : vector<8x32xf32>
    %cst_36 = arith.constant 1.000000e+00 : f32
    %111 = vector.broadcast %cst_36 : f32 to vector<8x32xf32>
    %112 = arith.addf %111, %110 : vector<8x32xf32>
    %113 = arith.divf %111, %112 : vector<8x32xf32>
    %114 = arith.mulf %107, %113 : vector<8x32xf32>
    %115 = vector.broadcast %8 : f32 to vector<8x32xf32>
    %116 = arith.mulf %114, %115 : vector<8x32xf32>
    %c72 = arith.constant 72 : index
    %c0_37 = arith.constant 0 : index
    %117 = vector.load %arg11[%c72, %c0_37] : memref<80x32xf32, #tpu.memory_space<vmem>>, vector<8x32xf32>
    tpu.vector_store %arg11[%c72, %c0_37], %116 {strides = array<i32>} : memref<80x32xf32, #tpu.memory_space<vmem>>, vector<8x32xf32>,
    %c0_38 = arith.constant 0 : index
    %c0_39 = arith.constant 0 : index
    %c0_40 = arith.constant 0 : index
    %118 = vector.load %arg8[%c0_38, %c0_39, %c0_40] : memref<7x1x32xf32, #tpu.memory_space<vmem>>, vector<7x1x32xf32>
    %c5 = arith.constant 5 : index
    %c0_41 = arith.constant 0 : index
    %119 = vector.load %arg11[%c5, %c0_41] : memref<80x32xf32, #tpu.memory_space<vmem>>, vector<64x32xf32>
    %120 = vector.extract_strided_slice %118 {offsets = [0, 0, 0], sizes = [1, 1, 32], strides = [1, 1, 1]} : vector<7x1x32xf32> to vector<1x1x32xf32>
    %121 = vector.shape_cast %120 : vector<1x1x32xf32> to vector<1x32xf32>
    %122 = vector.broadcast %121 : vector<1x32xf32> to vector<64x32xf32>
    %123 = arith.mulf %119, %122 : vector<64x32xf32>
    %c6 = arith.constant 6 : index
    %c0_42 = arith.constant 0 : index
    %124 = vector.load %arg11[%c6, %c0_42] : memref<80x32xf32, #tpu.memory_space<vmem>>, vector<64x32xf32>
    %125 = vector.extract_strided_slice %118 {offsets = [1, 0, 0], sizes = [1, 1, 32], strides = [1, 1, 1]} : vector<7x1x32xf32> to vector<1x1x32xf32>
    %126 = vector.shape_cast %125 : vector<1x1x32xf32> to vector<1x32xf32>
    %127 = vector.broadcast %126 : vector<1x32xf32> to vector<64x32xf32>
    %128 = arith.mulf %124, %127 : vector<64x32xf32>
    %129 = arith.addf %123, %128 : vector<64x32xf32>
    %c7 = arith.constant 7 : index
    %c0_43 = arith.constant 0 : index
    %130 = vector.load %arg11[%c7, %c0_43] : memref<80x32xf32, #tpu.memory_space<vmem>>, vector<64x32xf32>
    %131 = vector.extract_strided_slice %118 {offsets = [2, 0, 0], sizes = [1, 1, 32], strides = [1, 1, 1]} : vector<7x1x32xf32> to vector<1x1x32xf32>
    %132 = vector.shape_cast %131 : vector<1x1x32xf32> to vector<1x32xf32>
    %133 = vector.broadcast %132 : vector<1x32xf32> to vector<64x32xf32>
    %134 = arith.mulf %130, %133 : vector<64x32xf32>
    %135 = arith.addf %129, %134 : vector<64x32xf32>
    %c8_44 = arith.constant 8 : index
    %c0_45 = arith.constant 0 : index
    %136 = vector.load %arg11[%c8_44, %c0_45] : memref<80x32xf32, #tpu.memory_space<vmem>>, vector<64x32xf32>
    %137 = vector.extract_strided_slice %118 {offsets = [3, 0, 0], sizes = [1, 1, 32], strides = [1, 1, 1]} : vector<7x1x32xf32> to vector<1x1x32xf32>
    %138 = vector.shape_cast %137 : vector<1x1x32xf32> to vector<1x32xf32>
    %139 = vector.broadcast %138 : vector<1x32xf32> to vector<64x32xf32>
    %140 = arith.mulf %136, %139 : vector<64x32xf32>
    %141 = arith.addf %135, %140 : vector<64x32xf32>
    %c9 = arith.constant 9 : index
    %c0_46 = arith.constant 0 : index
    %142 = vector.load %arg11[%c9, %c0_46] : memref<80x32xf32, #tpu.memory_space<vmem>>, vector<64x32xf32>
    %143 = vector.extract_strided_slice %118 {offsets = [4, 0, 0], sizes = [1, 1, 32], strides = [1, 1, 1]} : vector<7x1x32xf32> to vector<1x1x32xf32>
    %144 = vector.shape_cast %143 : vector<1x1x32xf32> to vector<1x32xf32>
    %145 = vector.broadcast %144 : vector<1x32xf32> to vector<64x32xf32>
    %146 = arith.mulf %142, %145 : vector<64x32xf32>
    %147 = arith.addf %141, %146 : vector<64x32xf32>
    %c10 = arith.constant 10 : index
    %c0_47 = arith.constant 0 : index
    %148 = vector.load %arg11[%c10, %c0_47] : memref<80x32xf32, #tpu.memory_space<vmem>>, vector<64x32xf32>
    %149 = vector.extract_strided_slice %118 {offsets = [5, 0, 0], sizes = [1, 1, 32], strides = [1, 1, 1]} : vector<7x1x32xf32> to vector<1x1x32xf32>
    %150 = vector.shape_cast %149 : vector<1x1x32xf32> to vector<1x32xf32>
    %151 = vector.broadcast %150 : vector<1x32xf32> to vector<64x32xf32>
    %152 = arith.mulf %148, %151 : vector<64x32xf32>
    %153 = arith.addf %147, %152 : vector<64x32xf32>
    %c11 = arith.constant 11 : index
    %c0_48 = arith.constant 0 : index
    %154 = vector.load %arg11[%c11, %c0_48] : memref<80x32xf32, #tpu.memory_space<vmem>>, vector<64x32xf32>
    %155 = vector.extract_strided_slice %118 {offsets = [6, 0, 0], sizes = [1, 1, 32], strides = [1, 1, 1]} : vector<7x1x32xf32> to vector<1x1x32xf32>
    %156 = vector.shape_cast %155 : vector<1x1x32xf32> to vector<1x32xf32>
    %157 = vector.broadcast %156 : vector<1x32xf32> to vector<64x32xf32>
    %158 = arith.mulf %154, %157 : vector<64x32xf32>
    %159 = arith.addf %153, %158 : vector<64x32xf32>
    %160 = arith.truncf %159 : vector<64x32xf32> to vector<64x32xbf16>
    %c0_49 = arith.constant 0 : index
    %c0_50 = arith.constant 0 : index
    %c0_51 = arith.constant 0 : index
    %161 = vector.load %arg9[%c0_49, %c0_50, %c0_51] : memref<1x64x32xbf16, #tpu.memory_space<vmem>>, vector<1x64x32xbf16>
    %162 = vector.shape_cast %161 : vector<1x64x32xbf16> to vector<64x32xbf16>
    %163 = vector.shape_cast %160 : vector<64x32xbf16> to vector<1x64x32xbf16>
    tpu.vector_store %arg9[%c0_49, %c0_50, %c0_51], %163 {strides = array<i32>} : memref<1x64x32xbf16, #tpu.memory_space<vmem>>, vector<1x64x32xbf16>,
    %cst_52 = arith.constant dense<0.000000e+00> : vector<32xf32>
    %164 = vector.multi_reduction <add>, %159, %cst_52 [0] : vector<64x32xf32> to vector<32xf32>
    %165 = vector.shape_cast %164 : vector<32xf32> to vector<1x32xf32>
    %c0_53 = arith.constant 0 : index
    %c0_54 = arith.constant 0 : index
    %c0_55 = arith.constant 0 : index
    %c0_56 = arith.constant 0 : index
    %166 = vector.load %arg10[%c0_53, %c0_54, %c0_55, %c0_56] : memref<1x1x2x32xf32, #tpu.memory_space<vmem>>, vector<1x1x1x32xf32>
    %167 = vector.shape_cast %166 : vector<1x1x1x32xf32> to vector<1x32xf32>
    %168 = vector.shape_cast %165 : vector<1x32xf32> to vector<1x1x1x32xf32>
    tpu.vector_store %arg10[%c0_53, %c0_54, %c0_55, %c0_56], %168 {strides = array<i32>} : memref<1x1x2x32xf32, #tpu.memory_space<vmem>>, vector<1x1x1x32xf32>,
    %169 = arith.mulf %159, %159 : vector<64x32xf32>
    %cst_57 = arith.constant dense<0.000000e+00> : vector<32xf32>
    %170 = vector.multi_reduction <add>, %169, %cst_57 [0] : vector<64x32xf32> to vector<32xf32>
    %171 = vector.shape_cast %170 : vector<32xf32> to vector<1x32xf32>
    %c0_58 = arith.constant 0 : index
    %c0_59 = arith.constant 0 : index
    %c1 = arith.constant 1 : index
    %c0_60 = arith.constant 0 : index
    %172 = vector.load %arg10[%c0_58, %c0_59, %c1, %c0_60] : memref<1x1x2x32xf32, #tpu.memory_space<vmem>>, vector<1x1x1x32xf32>
    %173 = vector.shape_cast %172 : vector<1x1x1x32xf32> to vector<1x32xf32>
    %174 = vector.shape_cast %171 : vector<1x32xf32> to vector<1x1x1x32xf32>
    tpu.vector_store %arg10[%c0_58, %c0_59, %c1, %c0_60], %174 {strides = array<i32>} : memref<1x1x2x32xf32, #tpu.memory_space<vmem>>, vector<1x1x1x32xf32>,
    return
  }
  func.func @transform_0(%arg0: i32, %arg1: i32) -> (i32, i32, i32) {
    %c0_i32 = arith.constant 0 : i32
    %c0_i32_0 = arith.constant 0 : i32
    return %arg0, %arg1, %c0_i32 : i32, i32, i32
  }
  func.func @transform_1(%arg0: i32, %arg1: i32) -> (i32, i32, i32) {
    %c8_i32 = arith.constant 8 : i32
    %0 = arith.muli %arg1, %c8_i32 : i32
    %c1_i32 = arith.constant 1 : i32
    %1 = arith.subi %0, %c1_i32 : i32
    %c0_i32 = arith.constant 0 : i32
    %2 = arith.maxsi %1, %c0_i32 : i32
    %c0_i32_0 = arith.constant 0 : i32
    %c0_i32_1 = arith.constant 0 : i32
    return %arg0, %2, %c0_i32_0 : i32, i32, i32
  }
  func.func @transform_2(%arg0: i32, %arg1: i32) -> (i32, i32, i32) {
    %c1_i32 = arith.constant 1 : i32
    %0 = arith.addi %arg1, %c1_i32 : i32
    %c8_i32 = arith.constant 8 : i32
    %1 = arith.muli %0, %c8_i32 : i32
    %c15_i32 = arith.constant 15 : i32
    %2 = arith.minsi %1, %c15_i32 : i32
    %c0_i32 = arith.constant 0 : i32
    %c0_i32_0 = arith.constant 0 : i32
    return %arg0, %2, %c0_i32 : i32, i32, i32
  }
  func.func @transform_3(%arg0: i32, %arg1: i32) -> (i32, i32) {
    %c0_i32 = arith.constant 0 : i32
    %c0_i32_0 = arith.constant 0 : i32
    %c0_i32_1 = arith.constant 0 : i32
    return %c0_i32, %c0_i32_0 : i32, i32
  }
  func.func @transform_4(%arg0: i32, %arg1: i32) -> (i32, i32) {
    %c0_i32 = arith.constant 0 : i32
    %c0_i32_0 = arith.constant 0 : i32
    %c0_i32_1 = arith.constant 0 : i32
    return %c0_i32, %c0_i32_0 : i32, i32
  }
  func.func @transform_5(%arg0: i32, %arg1: i32) -> (i32, i32) {
    %c0_i32 = arith.constant 0 : i32
    %c0_i32_0 = arith.constant 0 : i32
    %c0_i32_1 = arith.constant 0 : i32
    return %c0_i32, %c0_i32_0 : i32, i32
  }
  func.func @transform_6(%arg0: i32, %arg1: i32) -> (i32, i32, i32) {
    %c0_i32 = arith.constant 0 : i32
    %c0_i32_0 = arith.constant 0 : i32
    %c0_i32_1 = arith.constant 0 : i32
    %c0_i32_2 = arith.constant 0 : i32
    return %c0_i32, %c0_i32_0, %c0_i32_1 : i32, i32, i32
  }
  func.func @transform_7(%arg0: i32, %arg1: i32) -> (i32, i32, i32) {
    %c0_i32 = arith.constant 0 : i32
    %c0_i32_0 = arith.constant 0 : i32
    return %arg0, %arg1, %c0_i32 : i32, i32, i32
  }
  func.func @transform_8(%arg0: i32, %arg1: i32) -> (i32, i32, i32, i32) {
    %c0_i32 = arith.constant 0 : i32
    %c0_i32_0 = arith.constant 0 : i32
    %c0_i32_1 = arith.constant 0 : i32
    return %arg0, %arg1, %c0_i32, %c0_i32_0 : i32, i32, i32, i32
  }
}

</mosaic_0001>

<llo_original>
// kernel: tpu_custom_call.1
$region0: #{tpu_custom_call.1}
  #allocation0 [shape = 'u32[]', space=smem, size = 0x4, offset = 0x4, fixed_abs, tag = 'smem constant byte address 0x4 - core index']
  #allocation1 [shape = 'u32[144,128]{1,0:T(1,128)}', space=vmem, size = 0x12000, scoped, tag = 'internal scratch']
  #allocation2 [shape = 'f32[80,32]{1,0:T(8,128)}', space=vmem, size = 0xa000, scoped, tag = 'scratch operand']
  %s0 = inlined_call_operand.vmem [shape: f32[2,128,64], index: 0, kind: input, shape index: {}]
  %s1 = inlined_call_operand.vmem [shape: f32[2,128,64], index: 1, kind: input, shape index: {}]
  %s2 = inlined_call_operand.vmem [shape: f32[2,128,64], index: 2, kind: input, shape index: {}]
  %s3 = inlined_call_operand.vmem [shape: f32[1,64], index: 3, kind: input, shape index: {}]
  %s4 = inlined_call_operand.vmem [shape: f32[1,64], index: 4, kind: input, shape index: {}]
  %s5 = inlined_call_operand.vmem [shape: bf16[64,64], index: 5, kind: input, shape index: {}]
  %s6 = inlined_call_operand.vmem [shape: f32[7,1,32], index: 6, kind: input, shape index: {}]
  %s7 = inlined_call_operand.vmem [shape: bf16[2,128,32], index: 7, kind: output, shape index: {0}]
  %s8 = inlined_call_operand.hbm [shape: f32[2,2,2,32], index: 8, kind: output, shape index: {1}]
  %9 = xla_tuple %s7, %s8
  %s10 = sld [smem:[#allocation0]]
  $region69: #{tpu_custom_call.1} parent=0
    _
  %s12 = ssub.s32 1, %s10
  %s13 = scalar_select 0, %s12, %s10
  $region1: #{tpu_custom_call.1} parent=0
    #allocation3 [shape = 'u8[2048]{0}', space=vmem, size = 0x800, scoped, tag = 'output window, operand 1']
    #allocation4 [shape = 's32[2]{0}', space=sflag, size = 0x8, scoped, tag = 'scoped memory for tpu_custom_call.1']
    %14 = vsyncpa [#allocation4], 0
    %s15 = scalar_lea.sflag [#allocation4], 1
    %16 = vsyncpa %s15, 0
    loop: start=0, step=1, limit=6
    $region2: #{tpu_custom_call.1} parent=1 // loop_pre_header
      _
    $region3: #{tpu_custom_call.1} parent=1 // loop_header
      %s18 = sphi 0, %s22
      %p19 = scmp.ge.s32.totalorder %s18, 6
      %s25 = sphi 0, %s37
      %s26 = sphi 0, %s33
      %s27 = sphi 0, %s25
      %s28 = sphi 0, %s26
      %s29 = sphi 0, %s27
      %s30 = sphi 0, %s28
      %s42 = sphi 0, %s44
      %s45 = sphi 0, %s42
      %s46 = sphi 0, %s45
      %s62 = sphi 0, %s46
      %s78 = sphi 0, %s80
      %s81 = sphi 0, %s78
      %s82 = sphi 0, %s81
      %s98 = sphi 0, %s82
      %s114 = sphi 0, %s116
      %s117 = sphi 0, %s114
      %s118 = sphi 0, %s117
      %s134 = sphi 0, %s118
      %s138 = sphi 0, %s138
      %s140 = sphi 0, %s138
      %s141 = sphi 0, %s140
      %s155 = sphi 0, %s141
      %s159 = sphi 0, %s159
      %s161 = sphi 0, %s159
      %s162 = sphi 0, %s161
      %s176 = sphi 0, %s162
      %s180 = sphi 0, %s180
      %s182 = sphi 0, %s180
      %s183 = sphi 0, %s182
      %s197 = sphi 0, %s183
      %s201 = sphi 0, %s201
      %s203 = sphi 0, %s201
      %s204 = sphi 0, %s203
      %s218 = sphi 0, %s204
      %s226 = sphi 0, %s228
      %s229 = sphi 0, %s226
      %s230 = sphi 0, %s229
      %s246 = sphi 0, %s230
      %s254 = sphi 0, %s256
      %s257 = sphi 0, %s254
      %s258 = sphi 0, %s257
      %s274 = sphi 0, %s258
    $region4: #{tpu_custom_call.1} parent=1 // loop_header_branch
      %21 = sbr.rel (%p19) target = $region8
    $region5: #{tpu_custom_call.1} parent=1 // loop_body
      %s23 = ssub.s32 %s18, 1
      %s24 = ssub.s32 %s18, 2
      %s31 = sadd.s32 1, %s26
      %p32 = scmp.ge.s32.totalorder %s31, 2
      %s33 = scalar_select %p32, 0, %s31
      %s34 = sadd.s32 1, %s25
      %s35 = scalar_select %p32, %s34, %s25
      %p36 = scmp.ge.s32.totalorder %s35, 2
      %s37 = scalar_select %p36, 0, %s35
      %s38 = ssub.s32 %s25, %s37
      %s39 = ssub.s32 %s26, %s33
      %s40 = sor.u32 %s38, %s39
      %p41 = scmp.eq.s32.totalorder %s40, 0
      %s43 = sadd.s32 %s42, 1
      %s44 = scalar_select %p41, %s42, %s43
      %p47 = pneg %p41
      %p48 = scmp.eq.s32.totalorder %s18, 3
      %p49 = por %p47, %p48
      %p50 = scmp.ne.s32.totalorder %s42, %s45
      %p51 = scmp.eq.s32.totalorder %s18, 0
      %p52 = por %p50, %p51
      %p53 = scmp.ne.s32.totalorder %s42, %s45
      %p54 = scmp.eq.s32.totalorder %s23, 3
      %p55 = por %p53, %p54
      %p56 = scmp.ne.s32.totalorder %s45, %s46
      %p57 = scmp.eq.s32.totalorder %s23, 0
      %p58 = por %p56, %p57
      %p59 = scmp.ne.s32.totalorder %s45, %s46
      %p60 = scmp.eq.s32.totalorder %s24, 3
      %p61 = por %p59, %p60
      %p63 = scmp.ne.s32.totalorder %s46, %s62
      %p64 = scmp.eq.s32.totalorder %s24, 0
      %p65 = por %p63, %p64
      %s66 = smul.u32 %s26, 8
      %s67 = ssub.s32 %s66, 1
      %p68 = scmp.gt.s32.totalorder %s67, 0
      %s69 = scalar_select %p68, %s67, 0
      %s70 = smul.u32 %s33, 8
      %s71 = ssub.s32 %s70, 1
      %p72 = scmp.gt.s32.totalorder %s71, 0
      %s73 = scalar_select %p72, %s71, 0
      %s74 = ssub.s32 %s25, %s37
      %s75 = ssub.s32 %s69, %s73
      %s76 = sor.u32 %s74, %s75
      %p77 = scmp.eq.s32.totalorder %s76, 0
      %s79 = sadd.s32 %s78, 1
      %s80 = scalar_select %p77, %s78, %s79
      %p83 = pneg %p77
      %p84 = scmp.eq.s32.totalorder %s18, 3
      %p85 = por %p83, %p84
      %p86 = scmp.ne.s32.totalorder %s78, %s81
      %p87 = scmp.eq.s32.totalorder %s18, 0
      %p88 = por %p86, %p87
      %p89 = scmp.ne.s32.totalorder %s78, %s81
      %p90 = scmp.eq.s32.totalorder %s23, 3
      %p91 = por %p89, %p90
      %p92 = scmp.ne.s32.totalorder %s81, %s82
      %p93 = scmp.eq.s32.totalorder %s23, 0
      %p94 = por %p92, %p93
      %p95 = scmp.ne.s32.totalorder %s81, %s82
      %p96 = scmp.eq.s32.totalorder %s24, 3
      %p97 = por %p95, %p96
      %p99 = scmp.ne.s32.totalorder %s82, %s98
      %p100 = scmp.eq.s32.totalorder %s24, 0
      %p101 = por %p99, %p100
      %s102 = sadd.s32 %s26, 1
      %s103 = smul.u32 %s102, 8
      %p104 = scmp.lt.s32.totalorder %s103, 15
      %s105 = scalar_select %p104, %s103, 15
      %s106 = sadd.s32 %s33, 1
      %s107 = smul.u32 %s106, 8
      %p108 = scmp.lt.s32.totalorder %s107, 15
      %s109 = scalar_select %p108, %s107, 15
      %s110 = ssub.s32 %s25, %s37
      %s111 = ssub.s32 %s105, %s109
      %s112 = sor.u32 %s110, %s111
      %p113 = scmp.eq.s32.totalorder %s112, 0
      %s115 = sadd.s32 %s114, 1
      %s116 = scalar_select %p113, %s114, %s115
      %p119 = pneg %p113
      %p120 = scmp.eq.s32.totalorder %s18, 3
      %p121 = por %p119, %p120
      %p122 = scmp.ne.s32.totalorder %s114, %s117
      %p123 = scmp.eq.s32.totalorder %s18, 0
      %p124 = por %p122, %p123
      %p125 = scmp.ne.s32.totalorder %s114, %s117
      %p126 = scmp.eq.s32.totalorder %s23, 3
      %p127 = por %p125, %p126
      %p128 = scmp.ne.s32.totalorder %s117, %s118
      %p129 = scmp.eq.s32.totalorder %s23, 0
      %p130 = por %p128, %p129
      %p131 = scmp.ne.s32.totalorder %s117, %s118
      %p132 = scmp.eq.s32.totalorder %s24, 3
      %p133 = por %p131, %p132
      %p135 = scmp.ne.s32.totalorder %s118, %s134
      %p136 = scmp.eq.s32.totalorder %s24, 0
      %p137 = por %p135, %p136
      %s139 = sadd.s32 %s138, 1
      %p142 = scmp.eq.s32.totalorder %s18, 3
      %p143 = scmp.ne.s32.totalorder %s138, %s140
      %p144 = scmp.eq.s32.totalorder %s18, 0
      %p145 = por %p143, %p144
      %p146 = scmp.ne.s32.totalorder %s138, %s140
      %p147 = scmp.eq.s32.totalorder %s23, 3
      %p148 = por %p146, %p147
      %p149 = scmp.ne.s32.totalorder %s140, %s141
      %p150 = scmp.eq.s32.totalorder %s23, 0
      %p151 = por %p149, %p150
      %p152 = scmp.ne.s32.totalorder %s140, %s141
      %p153 = scmp.eq.s32.totalorder %s24, 3
      %p154 = por %p152, %p153
      %p156 = scmp.ne.s32.totalorder %s141, %s155
      %p157 = scmp.eq.s32.totalorder %s24, 0
      %p158 = por %p156, %p157
      %s160 = sadd.s32 %s159, 1
      %p163 = scmp.eq.s32.totalorder %s18, 3
      %p164 = scmp.ne.s32.totalorder %s159, %s161
      %p165 = scmp.eq.s32.totalorder %s18, 0
      %p166 = por %p164, %p165
      %p167 = scmp.ne.s32.totalorder %s159, %s161
      %p168 = scmp.eq.s32.totalorder %s23, 3
      %p169 = por %p167, %p168
      %p170 = scmp.ne.s32.totalorder %s161, %s162
      %p171 = scmp.eq.s32.totalorder %s23, 0
      %p172 = por %p170, %p171
      %p173 = scmp.ne.s32.totalorder %s161, %s162
      %p174 = scmp.eq.s32.totalorder %s24, 3
      %p175 = por %p173, %p174
      %p177 = scmp.ne.s32.totalorder %s162, %s176
      %p178 = scmp.eq.s32.totalorder %s24, 0
      %p179 = por %p177, %p178
      %s181 = sadd.s32 %s180, 1
      %p184 = scmp.eq.s32.totalorder %s18, 3
      %p185 = scmp.ne.s32.totalorder %s180, %s182
      %p186 = scmp.eq.s32.totalorder %s18, 0
      %p187 = por %p185, %p186
      %p188 = scmp.ne.s32.totalorder %s180, %s182
      %p189 = scmp.eq.s32.totalorder %s23, 3
      %p190 = por %p188, %p189
      %p191 = scmp.ne.s32.totalorder %s182, %s183
      %p192 = scmp.eq.s32.totalorder %s23, 0
      %p193 = por %p191, %p192
      %p194 = scmp.ne.s32.totalorder %s182, %s183
      %p195 = scmp.eq.s32.totalorder %s24, 3
      %p196 = por %p194, %p195
      %p198 = scmp.ne.s32.totalorder %s183, %s197
      %p199 = scmp.eq.s32.totalorder %s24, 0
      %p200 = por %p198, %p199
      %s202 = sadd.s32 %s201, 1
      %p205 = scmp.eq.s32.totalorder %s18, 3
      %p206 = scmp.ne.s32.totalorder %s201, %s203
      %p207 = scmp.eq.s32.totalorder %s18, 0
      %p208 = por %p206, %p207
      %p209 = scmp.ne.s32.totalorder %s201, %s203
      %p210 = scmp.eq.s32.totalorder %s23, 3
      %p211 = por %p209, %p210
      %p212 = scmp.ne.s32.totalorder %s203, %s204
      %p213 = scmp.eq.s32.totalorder %s23, 0
      %p214 = por %p212, %p213
      %p215 = scmp.ne.s32.totalorder %s203, %s204
      %p216 = scmp.eq.s32.totalorder %s24, 3
      %p217 = por %p215, %p216
      %p219 = scmp.ne.s32.totalorder %s204, %s218
      %p220 = scmp.eq.s32.totalorder %s24, 0
      %p221 = por %p219, %p220
      %s222 = ssub.s32 %s25, %s37
      %s223 = ssub.s32 %s26, %s33
      %s224 = sor.u32 %s222, %s223
      %p225 = scmp.eq.s32.totalorder %s224, 0
      %s227 = sadd.s32 %s226, 1
      %s228 = scalar_select %p225, %s226, %s227
      %p231 = pneg %p225
      %p232 = scmp.eq.s32.totalorder %s18, 3
      %p233 = por %p231, %p232
      %p234 = scmp.ne.s32.totalorder %s226, %s229
      %p235 = scmp.eq.s32.totalorder %s18, 0
      %p236 = por %p234, %p235
      %p237 = scmp.ne.s32.totalorder %s226, %s229
      %p238 = scmp.eq.s32.totalorder %s23, 3
      %p239 = por %p237, %p238
      %p240 = scmp.ne.s32.totalorder %s229, %s230
      %p241 = scmp.eq.s32.totalorder %s23, 0
      %p242 = por %p240, %p241
      %p243 = scmp.ne.s32.totalorder %s229, %s230
      %p244 = scmp.eq.s32.totalorder %s24, 3
      %p245 = por %p243, %p244
      %p247 = scmp.ne.s32.totalorder %s230, %s246
      %p248 = scmp.eq.s32.totalorder %s24, 0
      %p249 = por %p247, %p248
      %s250 = ssub.s32 %s25, %s37
      %s251 = ssub.s32 %s26, %s33
      %s252 = sor.u32 %s250, %s251
      %p253 = scmp.eq.s32.totalorder %s252, 0
      %s255 = sadd.s32 %s254, 1
      %s256 = scalar_select %p253, %s254, %s255
      %p259 = pneg %p253
      %p260 = scmp.eq.s32.totalorder %s18, 3
      %p261 = por %p259, %p260
      %p262 = scmp.ne.s32.totalorder %s254, %s257
      %p263 = scmp.eq.s32.totalorder %s18, 0
      %p264 = por %p262, %p263
      %p265 = scmp.ne.s32.totalorder %s254, %s257
      %p266 = scmp.eq.s32.totalorder %s23, 3
      %p267 = por %p265, %p266
      %p268 = scmp.ne.s32.totalorder %s257, %s258
      %p269 = scmp.eq.s32.totalorder %s23, 0
      %p270 = por %p268, %p269
      %p271 = scmp.ne.s32.totalorder %s257, %s258
      %p272 = scmp.eq.s32.totalorder %s24, 3
      %p273 = por %p271, %p272
      %p275 = scmp.ne.s32.totalorder %s258, %s274
      %p276 = scmp.eq.s32.totalorder %s24, 0
      %p277 = por %p275, %p276
      %p278 = scmp.le.s32.totalorder 1, %s18
      %p279 = scmp.lt.s32.totalorder %s18, 5
      %p280 = pnand %p278, %p279
      %p281 = pneg %p280
      // Predicated region
      $region9: #{tpu_custom_call.1} parent=5 // pred_check
        _
      $region10: #{tpu_custom_call.1} parent=5 // pred_check_branch
        %283 = sbr.rel (%p280) target = $region12
      $region11: #{tpu_custom_call.1} parent=5 // pred_region
        %s284 = ssub.s32 %s18, 1
        // Predicated region
        $region13: #{tpu_custom_call.1} parent=11 // pred_check
          %p285 = pneg %p151
        $region14: #{tpu_custom_call.1} parent=11 // pred_check_branch
          %287 = sbr.rel (%p285) target = $region16
        $region15: #{tpu_custom_call.1} parent=11 // pred_region
          _
        $region16: #{tpu_custom_call.1} parent=11 // pred_fallthru
          _
        // Predicated region
        $region17: #{tpu_custom_call.1} parent=11 // pred_check
          %p288 = pneg %p172
        $region18: #{tpu_custom_call.1} parent=11 // pred_check_branch
          %290 = sbr.rel (%p288) target = $region20
        $region19: #{tpu_custom_call.1} parent=11 // pred_region
          _
        $region20: #{tpu_custom_call.1} parent=11 // pred_fallthru
          _
        // Predicated region
        $region21: #{tpu_custom_call.1} parent=11 // pred_check
          %p291 = pneg %p193
        $region22: #{tpu_custom_call.1} parent=11 // pred_check_branch
          %293 = sbr.rel (%p291) target = $region24
        $region23: #{tpu_custom_call.1} parent=11 // pred_region
          _
        $region24: #{tpu_custom_call.1} parent=11 // pred_fallthru
          _
        // Predicated region
        $region25: #{tpu_custom_call.1} parent=11 // pred_check
          %p294 = pneg %p214
        $region26: #{tpu_custom_call.1} parent=11 // pred_check_branch
          %296 = sbr.rel (%p294) target = $region28
        $region27: #{tpu_custom_call.1} parent=11 // pred_region
          _
        $region28: #{tpu_custom_call.1} parent=11 // pred_fallthru
          _
      $region12: #{tpu_custom_call.1} parent=5 // pred_fallthru
        _
      %p297 = scmp.lt.s32.totalorder %s18, 4
      // Predicated region
      $region29: #{tpu_custom_call.1} parent=5 // pred_check
        %p298 = pneg %p297
      $region30: #{tpu_custom_call.1} parent=5 // pred_check_branch
        %300 = sbr.rel (%p298) target = $region32
      $region31: #{tpu_custom_call.1} parent=5 // pred_region
        // Predicated region
        $region33: #{tpu_custom_call.1} parent=31 // pred_check
          %p301 = pneg %p52
        $region34: #{tpu_custom_call.1} parent=31 // pred_check_branch
          %303 = sbr.rel (%p301) target = $region36
        $region35: #{tpu_custom_call.1} parent=31 // pred_region
          %s304 = smul.u32 8, %s26
          %p305 = scmp.lt.s32.totalorder %s25, 1
          %s306 = scalar_select %p305, %s25, 1
          %p307 = scmp.lt.s32.totalorder %s304, 15
          %s308 = scalar_select %p307, %s304, 15
          %s309 = smul.addr %s306, 16
          %s310 = sadd.s32 %s308, %s309
          %s311 = smul.addr %s310, 8
          %s312 = scalar_lea.vmem %s0, %s311
          %s313 = smul.u32 8, %s26
        $region36: #{tpu_custom_call.1} parent=31 // pred_fallthru
          _
        // Predicated region
        $region37: #{tpu_custom_call.1} parent=31 // pred_check
          %p314 = pneg %p88
        $region38: #{tpu_custom_call.1} parent=31 // pred_check_branch
          %316 = sbr.rel (%p314) target = $region40
        $region39: #{tpu_custom_call.1} parent=31 // pred_region
          %s317 = smul.u32 %s26, 8
          %s318 = ssub.s32 %s317, 1
          %p319 = scmp.gt.s32.totalorder %s318, 0
          %s320 = scalar_select %p319, %s318, 0
          %p321 = scmp.lt.s32.totalorder %s25, 1
          %s322 = scalar_select %p321, %s25, 1
          %p323 = scmp.lt.s32.totalorder %s320, 15
          %s324 = scalar_select %p323, %s320, 15
          %s325 = smul.addr %s322, 16
          %s326 = sadd.s32 %s324, %s325
          %s327 = smul.addr %s326, 8
          %s328 = scalar_lea.vmem %s1, %s327
          %s329 = smul.u32 %s26, 8
          %s330 = ssub.s32 %s329, 1
          %p331 = scmp.gt.s32.totalorder %s330, 0
          %s332 = scalar_select %p331, %s330, 0
        $region40: #{tpu_custom_call.1} parent=31 // pred_fallthru
          _
        // Predicated region
        $region41: #{tpu_custom_call.1} parent=31 // pred_check
          %p333 = pneg %p124
        $region42: #{tpu_custom_call.1} parent=31 // pred_check_branch
          %335 = sbr.rel (%p333) target = $region44
        $region43: #{tpu_custom_call.1} parent=31 // pred_region
          %s336 = sadd.s32 %s26, 1
          %s337 = smul.u32 %s336, 8
          %p338 = scmp.lt.s32.totalorder %s337, 15
          %s339 = scalar_select %p338, %s337, 15
          %p340 = scmp.lt.s32.totalorder %s25, 1
          %s341 = scalar_select %p340, %s25, 1
          %p342 = scmp.lt.s32.totalorder %s339, 15
          %s343 = scalar_select %p342, %s339, 15
          %s344 = smul.addr %s341, 16
          %s345 = sadd.s32 %s343, %s344
          %s346 = smul.addr %s345, 8
          %s347 = scalar_lea.vmem %s2, %s346
          %s348 = sadd.s32 %s26, 1
          %s349 = smul.u32 %s348, 8
          %p350 = scmp.lt.s32.totalorder %s349, 15
          %s351 = scalar_select %p350, %s349, 15
        $region44: #{tpu_custom_call.1} parent=31 // pred_fallthru
          _
      $region32: #{tpu_custom_call.1} parent=5 // pred_fallthru
        _
      %p352 = scmp.le.s32.totalorder 1, %s18
      %p353 = scmp.lt.s32.totalorder %s18, 5
      %p354 = pnand %p352, %p353
      %p355 = pneg %p354
      // Predicated region
      $region45: #{tpu_custom_call.1} parent=5 // pred_check
        _
      $region46: #{tpu_custom_call.1} parent=5 // pred_check_branch
        %357 = sbr.rel (%p354) target = $region48
      $region47: #{tpu_custom_call.1} parent=5 // pred_region
        %s358 = ssub.s32 %s18, 1
        %s359 = smul.u32 8, %s28
        %p360 = scmp.lt.s32.totalorder %s27, 1
        %s361 = scalar_select %p360, %s27, 1
        %p362 = scmp.lt.s32.totalorder %s359, 15
        %s363 = scalar_select %p362, %s359, 15
        %s364 = smul.addr %s361, 16
        %s365 = sadd.s32 %s363, %s364
        %s366 = smul.addr %s365, 8
        %s367 = scalar_lea.vmem %s0, %s366
        %p368 = pneg %p58
        %p369 = pneg %p55
        %s370 = smul.u32 %s28, 8
        %s371 = ssub.s32 %s370, 1
        %p372 = scmp.gt.s32.totalorder %s371, 0
        %s373 = scalar_select %p372, %s371, 0
        %p374 = scmp.lt.s32.totalorder %s27, 1
        %s375 = scalar_select %p374, %s27, 1
        %p376 = scmp.lt.s32.totalorder %s373, 15
        %s377 = scalar_select %p376, %s373, 15
        %s378 = smul.addr %s375, 16
        %s379 = sadd.s32 %s377, %s378
        %s380 = smul.addr %s379, 8
        %s381 = scalar_lea.vmem %s1, %s380
        %p382 = pneg %p94
        %p383 = pneg %p91
        %s384 = sadd.s32 %s28, 1
        %s385 = smul.u32 %s384, 8
        %p386 = scmp.lt.s32.totalorder %s385, 15
        %s387 = scalar_select %p386, %s385, 15
        %p388 = scmp.lt.s32.totalorder %s27, 1
        %s389 = scalar_select %p388, %s27, 1
        %p390 = scmp.lt.s32.totalorder %s387, 15
        %s391 = scalar_select %p390, %s387, 15
        %s392 = smul.addr %s389, 16
        %s393 = sadd.s32 %s391, %s392
        %s394 = smul.addr %s393, 8
        %s395 = scalar_lea.vmem %s2, %s394
        %p396 = pneg %p130
        %p397 = pneg %p127
        %p398 = pneg %p151
        %p399 = pneg %p148
        %p400 = pneg %p172
        %p401 = pneg %p169
        %p402 = pneg %p193
        %p403 = pneg %p190
        %p404 = pneg %p214
        %p405 = pneg %p211
        %p406 = pneg %p242
        %p407 = pneg %p239
        %s408 = smul.u32 8, %s28
        %p409 = scmp.lt.s32.totalorder %s27, 1
        %s410 = scalar_select %p409, %s27, 1
        %p411 = scmp.lt.s32.totalorder %s408, 15
        %s412 = scalar_select %p411, %s408, 15
        %s413 = smul.addr %s410, 16
        %s414 = sadd.s32 %s412, %s413
        %s415 = smul.addr %s414, 4
        %s416 = scalar_lea.vmem %s7, %s415
        %p417 = pneg %p270
        %p418 = pneg %p267
        %s419 = sand.u32 %s257, 1
        %s420 = scalar_lea.sflag [#allocation4], %s419
        %s421 = sand.u32 %s257, 1
        %s422 = smul.addr %s421, 2
        %s423 = scalar_lea.vmem [#allocation3], %s422
        %s424 = smul.u32 8, %s28
        %p425 = scmp.lt.s32.totalorder %s27, 1
        %s426 = scalar_select %p425, %s27, 1
        %p427 = scmp.lt.s32.totalorder %s424, 15
        %s428 = scalar_select %p427, %s424, 15
        %s429 = smul.addr %s426, 16
        %s430 = sadd.s32 %s428, %s429
        %s431 = smul.addr %s430, 8
        %s432 = scalar_lea.vmem %s0, %s431
        %s433 = smul.u32 8, %s28
        %s434 = smul.u32 %s28, 8
        %s435 = ssub.s32 %s434, 1
        %p436 = scmp.gt.s32.totalorder %s435, 0
        %s437 = scalar_select %p436, %s435, 0
        %p438 = scmp.lt.s32.totalorder %s27, 1
        %s439 = scalar_select %p438, %s27, 1
        %p440 = scmp.lt.s32.totalorder %s437, 15
        %s441 = scalar_select %p440, %s437, 15
        %s442 = smul.addr %s439, 16
        %s443 = sadd.s32 %s441, %s442
        %s444 = smul.addr %s443, 8
        %s445 = scalar_lea.vmem %s1, %s444
        %s446 = smul.u32 %s28, 8
        %s447 = ssub.s32 %s446, 1
        %p448 = scmp.gt.s32.totalorder %s447, 0
        %s449 = scalar_select %p448, %s447, 0
        %s450 = sadd.s32 %s28, 1
        %s451 = smul.u32 %s450, 8
        %p452 = scmp.lt.s32.totalorder %s451, 15
        %s453 = scalar_select %p452, %s451, 15
        %p454 = scmp.lt.s32.totalorder %s27, 1
        %s455 = scalar_select %p454, %s27, 1
        %p456 = scmp.lt.s32.totalorder %s453, 15
        %s457 = scalar_select %p456, %s453, 15
        %s458 = smul.addr %s455, 16
        %s459 = sadd.s32 %s457, %s458
        %s460 = smul.addr %s459, 8
        %s461 = scalar_lea.vmem %s2, %s460
        %s462 = sadd.s32 %s28, 1
        %s463 = smul.u32 %s462, 8
        %p464 = scmp.lt.s32.totalorder %s463, 15
        %s465 = scalar_select %p464, %s463, 15
        %s466 = smul.u32 8, %s28
        %p467 = scmp.lt.s32.totalorder %s27, 1
        %s468 = scalar_select %p467, %s27, 1
        %p469 = scmp.lt.s32.totalorder %s466, 15
        %s470 = scalar_select %p469, %s466, 15
        %s471 = smul.addr %s468, 16
        %s472 = sadd.s32 %s470, %s471
        %s473 = smul.addr %s472, 4
        %s474 = scalar_lea.vmem %s7, %s473
        %s475 = smul.u32 8, %s28
        %v477 = vld [vmem:[%s3] sm:$0x1]
        %v478 = vld [vmem:[%s4] sm:$0x1]
        %v479 = vld [vmem:[%s5] sm:$0xf]
        %v480 = vld [vmem:[%s5 + $0x4] sm:$0xf]
        %v481 = vld [vmem:[%s5 + $0x8] sm:$0xf]
        %v482 = vld [vmem:[%s5 + $0xc] sm:$0xf]
        %v483 = vld [vmem:[%s5 + $0x10] sm:$0xf]
        %v484 = vld [vmem:[%s5 + $0x14] sm:$0xf]
        %v485 = vld [vmem:[%s5 + $0x18] sm:$0xf]
        %v486 = vld [vmem:[%s5 + $0x1c] sm:$0xf]
        %p487 = scmp.gt.s32.totalorder %s28, 0
        %s488 = scalar_select %p487, 1, 0
        %s489 = scvt.s32.f32 %s488
        %p490 = scmp.lt.s32.totalorder %s28, 1
        %s491 = scalar_select %p490, 1, 0
        %s492 = scvt.s32.f32 %s491
        %v493 = vld [vmem:[%s445] sm:$0xff]
        %vm494 = vcmask 523264
        %v495 = vsel %vm494, %v493, 0.0
        %496 = vadd.xlane.f32.xlu0 %v495
        %v497 = vpop.xlane.xlu0 %496
        %v498 = vrcp.pop 64.0
        %v499 = vmul.f32 %v497, %v498
        %v500 = vsub.f32 %v493, %v499
        %v501 = vmul.f32 %v500, %v500
        %v502 = vsel %vm494, %v501, 0.0
        %503 = vadd.xlane.f32.xlu0 %v502
        %v504 = vpop.xlane.xlu0 %503
        %v505 = vmul.f32 %v504, %v498
        %v506 = vadd.f32 %v505, 1e-05
        %v507 = vrsqrt.pop %v506
        %v508 = vmul.f32 %v500, %v507
        %v510 = vlaneseq
        %v511 = vshrl.u32 %v510, 7
        %v512 = vsub.s32 0, %v511
        %v513 = vrot.slane %v477, %v512
        %v515 = vmul.f32 %v508, %v513
        %v517 = vlaneseq
        %v518 = vshrl.u32 %v517, 7
        %v519 = vsub.s32 0, %v518
        %v520 = vrot.slane %v478, %v519
        %v522 = vadd.f32 %v515, %v520
        %v523 = vpack.c.bf16 %v522, %v522
        %v532 = vunpack.c.l.b16 %v479
        %v533 = vunpack.c.l.b16 %v480
        %v534 = vunpack.c.l.b16 %v481
        %v535 = vunpack.c.l.b16 %v482
        %v536 = vunpack.c.l.b16 %v483
        %v537 = vunpack.c.l.b16 %v484
        %v538 = vunpack.c.l.b16 %v485
        %v539 = vunpack.c.l.b16 %v486
        %v540 = vpack.c.b16 %v533, %v532
        %v541 = vpack.c.b16 %v535, %v534
        %v542 = vpack.c.b16 %v537, %v536
        %v543 = vpack.c.b16 %v539, %v538
        %v549 = vsel %vm494, %v523, 0
        %551 = vmatprep.subr.bf16.mxu0 0
        %552 = vmatpush1.bf16.msra.mxu0 %v540
        %553 = vmatprep.subr.bf16.mxu0 0
        %554 = vmatpush1.bf16.msra.mxu0 %v541
        %555 = vmatprep.subr.bf16.mxu0 0
        %556 = vmatpush1.bf16.msra.mxu0 %v542
        %557 = vmatprep.subr.bf16.mxu0 0
        %558 = vmatpush1.bf16.msra.mxu0 %v543
        %559 = vmatprep.subr.bf16.mxu0 0
        %560 = vmatpush1.bf16.msra.mxu0 0
        %561 = vmatprep.subr.bf16.mxu0 0
        %562 = vmatpush1.bf16.msra.mxu0 0
        %563 = vmatprep.subr.bf16.mxu0 0
        %564 = vmatpush1.bf16.msra.mxu0 0
        %565 = vmatprep.subr.bf16.mxu0 0
        %566 = vmatpush1.bf16.msra.mxu0 0
        %567 = vmatprep.subr.bf16.mxu0 0
        %568 = vmatpush1.bf16.msra.mxu0 0
        %569 = vmatprep.subr.bf16.mxu0 0
        %570 = vmatpush1.bf16.msra.mxu0 0
        %571 = vmatprep.subr.bf16.mxu0 0
        %572 = vmatpush1.bf16.msra.mxu0 0
        %573 = vmatprep.subr.bf16.mxu0 0
        %574 = vmatpush1.bf16.msra.mxu0 0
        %575 = vmatprep.subr.bf16.mxu0 0
        %576 = vmatpush1.bf16.msra.mxu0 0
        %577 = vmatprep.subr.bf16.mxu0 0
        %578 = vmatpush1.bf16.msra.mxu0 0
        %579 = vmatprep.subr.bf16.mxu0 0
        %580 = vmatpush1.bf16.msra.mxu0 0
        %581 = vmatprep.subr.bf16.mxu0 0
        %582 = vmatpush1.bf16.msra.mxu0 0
        %583 = vmatprep.mubr.bf16.mxu0 0
        %584 = vmatmul.mubr.bf16.gmra.mrb[0].mxu0 %v549
        %v585 = vpop.f32.mrb[0].mxu0
        %v586 = vadd.f32 0.0, %v585
        %v587 = vpop.f32.mrb[0].mxu0
        %v588 = vpop.f32.mrb[0].mxu0
        %v589 = vpop.f32.mrb[0].mxu0
        %590 = vdwg.mxu0
        %v591 = vxor.u32 %v586, 2147483648
        %v592 = vmul.f32 %v591, 1.442695
        %v593 = vpow.pop %v592
        %v594 = vadd.f32 %v593, 1.0
        %v595 = vrcp.pop %v594
        %v596 = vmul.f32 1.0, %v595
        %598 = vrot.lane.b32.xlu0 %v596, 96
        %v599 = vpop.permute.xlu0 %598
        %v601 = vmul.f32 %v586, %v599
        %v602 = vstv %s489
        %v603 = vmul.f32 %v601, %v602
        %vm604 = vcmask 261120
        %605 = vst.msk [vmem:[#allocation2] sm:$0xff] %vm604, %v603
        %v606 = vld [vmem:[%s432] sm:$0xff]
        %v607 = vld [vmem:[%s432 + $0x8] sm:$0xff]
        %v608 = vld [vmem:[%s432 + $0x10] sm:$0xff]
        %v609 = vld [vmem:[%s432 + $0x18] sm:$0xff]
        %v610 = vld [vmem:[%s432 + $0x20] sm:$0xff]
        %v611 = vld [vmem:[%s432 + $0x28] sm:$0xff]
        %v612 = vld [vmem:[%s432 + $0x30] sm:$0xff]
        %v613 = vld [vmem:[%s432 + $0x38] sm:$0xff]
        %v614 = vsel %vm494, %v606, 0.0
        %615 = vadd.xlane.f32.xlu0 %v614
        %v616 = vpop.xlane.xlu0 %615
        %v617 = vsel %vm494, %v607, 0.0
        %618 = vadd.xlane.f32.xlu0 %v617
        %v619 = vpop.xlane.xlu0 %618
        %v620 = vsel %vm494, %v608, 0.0
        %621 = vadd.xlane.f32.xlu0 %v620
        %v622 = vpop.xlane.xlu0 %621
        %v623 = vsel %vm494, %v609, 0.0
        %624 = vadd.xlane.f32.xlu0 %v623
        %v625 = vpop.xlane.xlu0 %624
        %v626 = vsel %vm494, %v610, 0.0
        %627 = vadd.xlane.f32.xlu0 %v626
        %v628 = vpop.xlane.xlu0 %627
        %v629 = vsel %vm494, %v611, 0.0
        %630 = vadd.xlane.f32.xlu0 %v629
        %v631 = vpop.xlane.xlu0 %630
        %v632 = vsel %vm494, %v612, 0.0
        %633 = vadd.xlane.f32.xlu0 %v632
        %v634 = vpop.xlane.xlu0 %633
        %v635 = vsel %vm494, %v613, 0.0
        %636 = vadd.xlane.f32.xlu0 %v635
        %v637 = vpop.xlane.xlu0 %636
        %v638 = vmul.f32 %v616, %v498
        %v639 = vmul.f32 %v619, %v498
        %v640 = vmul.f32 %v622, %v498
        %v641 = vmul.f32 %v625, %v498
        %v642 = vmul.f32 %v628, %v498
        %v643 = vmul.f32 %v631, %v498
        %v644 = vmul.f32 %v634, %v498
        %v645 = vmul.f32 %v637, %v498
        %v646 = vsub.f32 %v606, %v638
        %v647 = vsub.f32 %v607, %v639
        %v648 = vsub.f32 %v608, %v640
        %v649 = vsub.f32 %v609, %v641
        %v650 = vsub.f32 %v610, %v642
        %v651 = vsub.f32 %v611, %v643
        %v652 = vsub.f32 %v612, %v644
        %v653 = vsub.f32 %v613, %v645
        %v654 = vmul.f32 %v646, %v646
        %v655 = vmul.f32 %v647, %v647
        %v656 = vmul.f32 %v648, %v648
        %v657 = vmul.f32 %v649, %v649
        %v658 = vmul.f32 %v650, %v650
        %v659 = vmul.f32 %v651, %v651
        %v660 = vmul.f32 %v652, %v652
        %v661 = vmul.f32 %v653, %v653
        %v662 = vsel %vm494, %v654, 0.0
        %663 = vadd.xlane.f32.xlu0 %v662
        %v664 = vpop.xlane.xlu0 %663
        %v665 = vsel %vm494, %v655, 0.0
        %666 = vadd.xlane.f32.xlu0 %v665
        %v667 = vpop.xlane.xlu0 %666
        %v668 = vsel %vm494, %v656, 0.0
        %669 = vadd.xlane.f32.xlu0 %v668
        %v670 = vpop.xlane.xlu0 %669
        %v671 = vsel %vm494, %v657, 0.0
        %672 = vadd.xlane.f32.xlu0 %v671
        %v673 = vpop.xlane.xlu0 %672
        %v674 = vsel %vm494, %v658, 0.0
        %675 = vadd.xlane.f32.xlu0 %v674
        %v676 = vpop.xlane.xlu0 %675
        %v677 = vsel %vm494, %v659, 0.0
        %678 = vadd.xlane.f32.xlu0 %v677
        %v679 = vpop.xlane.xlu0 %678
        %v680 = vsel %vm494, %v660, 0.0
        %681 = vadd.xlane.f32.xlu0 %v680
        %v682 = vpop.xlane.xlu0 %681
        %v683 = vsel %vm494, %v661, 0.0
        %684 = vadd.xlane.f32.xlu0 %v683
        %v685 = vpop.xlane.xlu0 %684
        %v686 = vmul.f32 %v664, %v498
        %v687 = vmul.f32 %v667, %v498
        %v688 = vmul.f32 %v670, %v498
        %v689 = vmul.f32 %v673, %v498
        %v690 = vmul.f32 %v676, %v498
        %v691 = vmul.f32 %v679, %v498
        %v692 = vmul.f32 %v682, %v498
        %v693 = vmul.f32 %v685, %v498
        %v694 = vadd.f32 %v686, 1e-05
        %v695 = vadd.f32 %v687, 1e-05
        %v696 = vadd.f32 %v688, 1e-05
        %v697 = vadd.f32 %v689, 1e-05
        %v698 = vadd.f32 %v690, 1e-05
        %v699 = vadd.f32 %v691, 1e-05
        %v700 = vadd.f32 %v692, 1e-05
        %v701 = vadd.f32 %v693, 1e-05
        %v702 = vrsqrt.pop %v694
        %v703 = vrsqrt.pop %v695
        %v704 = vrsqrt.pop %v696
        %v705 = vrsqrt.pop %v697
        %v706 = vrsqrt.pop %v698
        %v707 = vrsqrt.pop %v699
        %v708 = vrsqrt.pop %v700
        %v709 = vrsqrt.pop %v701
        %v710 = vmul.f32 %v646, %v702
        %v711 = vmul.f32 %v647, %v703
        %v712 = vmul.f32 %v648, %v704
        %v713 = vmul.f32 %v649, %v705
        %v714 = vmul.f32 %v650, %v706
        %v715 = vmul.f32 %v651, %v707
        %v716 = vmul.f32 %v652, %v708
        %v717 = vmul.f32 %v653, %v709
        %v718 = vmul.f32 %v710, %v513
        %v719 = vmul.f32 %v711, %v513
        %v720 = vmul.f32 %v712, %v513
        %v721 = vmul.f32 %v713, %v513
        %v722 = vmul.f32 %v714, %v513
        %v723 = vmul.f32 %v715, %v513
        %v724 = vmul.f32 %v716, %v513
        %v725 = vmul.f32 %v717, %v513
        %v726 = vadd.f32 %v718, %v520
        %v727 = vadd.f32 %v719, %v520
        %v728 = vadd.f32 %v720, %v520
        %v729 = vadd.f32 %v721, %v520
        %v730 = vadd.f32 %v722, %v520
        %v731 = vadd.f32 %v723, %v520
        %v732 = vadd.f32 %v724, %v520
        %v733 = vadd.f32 %v725, %v520
        %v734 = vpack.c.bf16 %v727, %v726
        %v735 = vpack.c.bf16 %v729, %v728
        %v736 = vpack.c.bf16 %v731, %v730
        %v737 = vpack.c.bf16 %v733, %v732
        %v739 = vsel %vm494, %v734, 0
        %v742 = vsel %vm494, %v735, 0
        %v745 = vsel %vm494, %v736, 0
        %v748 = vsel %vm494, %v737, 0
        %750 = vmatprep.subr.bf16.mxu0 0
        %751 = vmatpush1.bf16.msra.mxu0 %v540
        %752 = vmatprep.subr.bf16.mxu0 0
        %753 = vmatpush1.bf16.msra.mxu0 %v541
        %754 = vmatprep.subr.bf16.mxu0 0
        %755 = vmatpush1.bf16.msra.mxu0 %v542
        %756 = vmatprep.subr.bf16.mxu0 0
        %757 = vmatpush1.bf16.msra.mxu0 %v543
        %758 = vmatprep.subr.bf16.mxu0 0
        %759 = vmatpush1.bf16.msra.mxu0 0
        %760 = vmatprep.subr.bf16.mxu0 0
        %761 = vmatpush1.bf16.msra.mxu0 0
        %762 = vmatprep.subr.bf16.mxu0 0
        %763 = vmatpush1.bf16.msra.mxu0 0
        %764 = vmatprep.subr.bf16.mxu0 0
        %765 = vmatpush1.bf16.msra.mxu0 0
        %766 = vmatprep.subr.bf16.mxu0 0
        %767 = vmatpush1.bf16.msra.mxu0 0
        %768 = vmatprep.subr.bf16.mxu0 0
        %769 = vmatpush1.bf16.msra.mxu0 0
        %770 = vmatprep.subr.bf16.mxu0 0
        %771 = vmatpush1.bf16.msra.mxu0 0
        %772 = vmatprep.subr.bf16.mxu0 0
        %773 = vmatpush1.bf16.msra.mxu0 0
        %774 = vmatprep.subr.bf16.mxu0 0
        %775 = vmatpush1.bf16.msra.mxu0 0
        %776 = vmatprep.subr.bf16.mxu0 0
        %777 = vmatpush1.bf16.msra.mxu0 0
        %778 = vmatprep.subr.bf16.mxu0 0
        %779 = vmatpush1.bf16.msra.mxu0 0
        %780 = vmatprep.subr.bf16.mxu0 0
        %781 = vmatpush1.bf16.msra.mxu0 0
        %782 = vmatprep.mubr.bf16.mxu0 0
        %783 = vmatmul.mubr.bf16.gmra.mrb[0].mxu0 %v739
        %v784 = vpop.f32.mrb[0].mxu0
        %v785 = vadd.f32 0.0, %v784
        %v786 = vpop.f32.mrb[0].mxu0
        %v787 = vpop.f32.mrb[0].mxu0
        %v788 = vadd.f32 0.0, %v787
        %v789 = vpop.f32.mrb[0].mxu0
        %790 = vmatprep.mubr.bf16.mxu0 0
        %791 = vmatmul.mubr.bf16.gmra.mrb[0].mxu0 %v742
        %v792 = vpop.f32.mrb[0].mxu0
        %v793 = vadd.f32 0.0, %v792
        %v794 = vpop.f32.mrb[0].mxu0
        %v795 = vpop.f32.mrb[0].mxu0
        %v796 = vadd.f32 0.0, %v795
        %v797 = vpop.f32.mrb[0].mxu0
        %798 = vmatprep.mubr.bf16.mxu0 0
        %799 = vmatmul.mubr.bf16.gmra.mrb[0].mxu0 %v745
        %v800 = vpop.f32.mrb[0].mxu0
        %v801 = vadd.f32 0.0, %v800
        %v802 = vpop.f32.mrb[0].mxu0
        %v803 = vpop.f32.mrb[0].mxu0
        %v804 = vadd.f32 0.0, %v803
        %v805 = vpop.f32.mrb[0].mxu0
        %806 = vmatprep.mubr.bf16.mxu0 0
        %807 = vmatmul.mubr.bf16.gmra.mrb[0].mxu0 %v748
        %v808 = vpop.f32.mrb[0].mxu0
        %v809 = vadd.f32 0.0, %v808
        %v810 = vpop.f32.mrb[0].mxu0
        %v811 = vpop.f32.mrb[0].mxu0
        %v812 = vadd.f32 0.0, %v811
        %v813 = vpop.f32.mrb[0].mxu0
        %814 = vdwg.mxu0
        %v815 = vxor.u32 %v785, 2147483648
        %v816 = vxor.u32 %v788, 2147483648
        %v817 = vxor.u32 %v793, 2147483648
        %v818 = vxor.u32 %v796, 2147483648
        %v819 = vxor.u32 %v801, 2147483648
        %v820 = vxor.u32 %v804, 2147483648
        %v821 = vxor.u32 %v809, 2147483648
        %v822 = vxor.u32 %v812, 2147483648
        %v823 = vmul.f32 %v815, 1.442695
        %v824 = vpow.pop %v823
        %v825 = vmul.f32 %v816, 1.442695
        %v826 = vpow.pop %v825
        %v827 = vmul.f32 %v817, 1.442695
        %v828 = vpow.pop %v827
        %v829 = vmul.f32 %v818, 1.442695
        %v830 = vpow.pop %v829
        %v831 = vmul.f32 %v819, 1.442695
        %v832 = vpow.pop %v831
        %v833 = vmul.f32 %v820, 1.442695
        %v834 = vpow.pop %v833
        %v835 = vmul.f32 %v821, 1.442695
        %v836 = vpow.pop %v835
        %v837 = vmul.f32 %v822, 1.442695
        %v838 = vpow.pop %v837
        %v839 = vadd.f32 %v824, 1.0
        %v840 = vadd.f32 %v826, 1.0
        %v841 = vadd.f32 %v828, 1.0
        %v842 = vadd.f32 %v830, 1.0
        %v843 = vadd.f32 %v832, 1.0
        %v844 = vadd.f32 %v834, 1.0
        %v845 = vadd.f32 %v836, 1.0
        %v846 = vadd.f32 %v838, 1.0
        %v847 = vrcp.pop %v839
        %v848 = vmul.f32 1.0, %v847
        %v849 = vrcp.pop %v840
        %v850 = vmul.f32 1.0, %v849
        %v851 = vrcp.pop %v841
        %v852 = vmul.f32 1.0, %v851
        %v853 = vrcp.pop %v842
        %v854 = vmul.f32 1.0, %v853
        %v855 = vrcp.pop %v843
        %v856 = vmul.f32 1.0, %v855
        %v857 = vrcp.pop %v844
        %v858 = vmul.f32 1.0, %v857
        %v859 = vrcp.pop %v845
        %v860 = vmul.f32 1.0, %v859
        %v861 = vrcp.pop %v846
        %v862 = vmul.f32 1.0, %v861
        %871 = vrot.lane.b32.xlu0 %v848, 96
        %v872 = vpop.permute.xlu0 %871
        %873 = vrot.lane.b32.xlu0 %v850, 96
        %v874 = vpop.permute.xlu0 %873
        %875 = vrot.lane.b32.xlu0 %v852, 96
        %v876 = vpop.permute.xlu0 %875
        %877 = vrot.lane.b32.xlu0 %v854, 96
        %v878 = vpop.permute.xlu0 %877
        %879 = vrot.lane.b32.xlu0 %v856, 96
        %v880 = vpop.permute.xlu0 %879
        %881 = vrot.lane.b32.xlu0 %v858, 96
        %v882 = vpop.permute.xlu0 %881
        %883 = vrot.lane.b32.xlu0 %v860, 96
        %v884 = vpop.permute.xlu0 %883
        %885 = vrot.lane.b32.xlu0 %v862, 96
        %v886 = vpop.permute.xlu0 %885
        %v895 = vmul.f32 %v785, %v872
        %v896 = vmul.f32 %v788, %v874
        %v897 = vmul.f32 %v793, %v876
        %v898 = vmul.f32 %v796, %v878
        %v899 = vmul.f32 %v801, %v880
        %v900 = vmul.f32 %v804, %v882
        %v901 = vmul.f32 %v809, %v884
        %v902 = vmul.f32 %v812, %v886
        %903 = vst.msk [vmem:[#allocation2 + $0x8] sm:$0xff] %vm604, %v895
        %904 = vst.msk [vmem:[#allocation2 + $0x10] sm:$0xff] %vm604, %v896
        %905 = vst.msk [vmem:[#allocation2 + $0x18] sm:$0xff] %vm604, %v897
        %906 = vst.msk [vmem:[#allocation2 + $0x20] sm:$0xff] %vm604, %v898
        %907 = vst.msk [vmem:[#allocation2 + $0x28] sm:$0xff] %vm604, %v899
        %908 = vst.msk [vmem:[#allocation2 + $0x30] sm:$0xff] %vm604, %v900
        %909 = vst.msk [vmem:[#allocation2 + $0x38] sm:$0xff] %vm604, %v901
        %910 = vst.msk [vmem:[#allocation2 + $0x40] sm:$0xff] %vm604, %v902
        %v911 = vld [vmem:[%s461] sm:$0xff]
        %v912 = vsel %vm494, %v911, 0.0
        %913 = vadd.xlane.f32.xlu0 %v912
        %v914 = vpop.xlane.xlu0 %913
        %v915 = vmul.f32 %v914, %v498
        %v916 = vsub.f32 %v911, %v915
        %v917 = vmul.f32 %v916, %v916
        %v918 = vsel %vm494, %v917, 0.0
        %919 = vadd.xlane.f32.xlu0 %v918
        %v920 = vpop.xlane.xlu0 %919
        %v921 = vmul.f32 %v920, %v498
        %v922 = vadd.f32 %v921, 1e-05
        %v923 = vrsqrt.pop %v922
        %v924 = vmul.f32 %v916, %v923
        %v925 = vmul.f32 %v924, %v513
        %v926 = vadd.f32 %v925, %v520
        %v927 = vpack.c.bf16 %v926, %v926
        %v929 = vsel %vm494, %v927, 0
        %931 = vmatprep.subr.bf16.mxu0 0
        %932 = vmatpush1.bf16.msra.mxu0 %v540
        %933 = vmatprep.subr.bf16.mxu0 0
        %934 = vmatpush1.bf16.msra.mxu0 %v541
        %935 = vmatprep.subr.bf16.mxu0 0
        %936 = vmatpush1.bf16.msra.mxu0 %v542
        %937 = vmatprep.subr.bf16.mxu0 0
        %938 = vmatpush1.bf16.msra.mxu0 %v543
        %939 = vmatprep.subr.bf16.mxu0 0
        %940 = vmatpush1.bf16.msra.mxu0 0
        %941 = vmatprep.subr.bf16.mxu0 0
        %942 = vmatpush1.bf16.msra.mxu0 0
        %943 = vmatprep.subr.bf16.mxu0 0
        %944 = vmatpush1.bf16.msra.mxu0 0
        %945 = vmatprep.subr.bf16.mxu0 0
        %946 = vmatpush1.bf16.msra.mxu0 0
        %947 = vmatprep.subr.bf16.mxu0 0
        %948 = vmatpush1.bf16.msra.mxu0 0
        %949 = vmatprep.subr.bf16.mxu0 0
        %950 = vmatpush1.bf16.msra.mxu0 0
        %951 = vmatprep.subr.bf16.mxu0 0
        %952 = vmatpush1.bf16.msra.mxu0 0
        %953 = vmatprep.subr.bf16.mxu0 0
        %954 = vmatpush1.bf16.msra.mxu0 0
        %955 = vmatprep.subr.bf16.mxu0 0
        %956 = vmatpush1.bf16.msra.mxu0 0
        %957 = vmatprep.subr.bf16.mxu0 0
        %958 = vmatpush1.bf16.msra.mxu0 0
        %959 = vmatprep.subr.bf16.mxu0 0
        %960 = vmatpush1.bf16.msra.mxu0 0
        %961 = vmatprep.subr.bf16.mxu0 0
        %962 = vmatpush1.bf16.msra.mxu0 0
        %963 = vmatprep.mubr.bf16.mxu0 0
        %964 = vmatmul.mubr.bf16.gmra.mrb[0].mxu0 %v929
        %v965 = vpop.f32.mrb[0].mxu0
        %v966 = vadd.f32 0.0, %v965
        %v967 = vpop.f32.mrb[0].mxu0
        %v968 = vpop.f32.mrb[0].mxu0
        %v969 = vpop.f32.mrb[0].mxu0
        %970 = vdwg.mxu0
        %v971 = vxor.u32 %v966, 2147483648
        %v972 = vmul.f32 %v971, 1.442695
        %v973 = vpow.pop %v972
        %v974 = vadd.f32 %v973, 1.0
        %v975 = vrcp.pop %v974
        %v976 = vmul.f32 1.0, %v975
        %978 = vrot.lane.b32.xlu0 %v976, 96
        %v979 = vpop.permute.xlu0 %978
        %v981 = vmul.f32 %v966, %v979
        %v982 = vstv %s492
        %v983 = vmul.f32 %v981, %v982
        %984 = vst.msk [vmem:[#allocation2 + $0x48] sm:$0xff] %vm604, %v983
        %v985 = vld [vmem:[%s6] sm:$0x1]
        %v986 = vld [vmem:[%s6 + $0x1] sm:$0x1]
        %v987 = vld [vmem:[%s6 + $0x2] sm:$0x1]
        %v988 = vld [vmem:[%s6 + $0x3] sm:$0x1]
        %v989 = vld [vmem:[%s6 + $0x4] sm:$0x1]
        %v990 = vld [vmem:[%s6 + $0x5] sm:$0x1]
        %v991 = vld [vmem:[%s6 + $0x6] sm:$0x1]
        %v992 = vld [vmem:[#allocation2 + $0x5] sm:$0xff]
        %v993 = vld [vmem:[#allocation2 + $0xd] sm:$0xff]
        %v994 = vld [vmem:[#allocation2 + $0x15] sm:$0xff]
        %v995 = vld [vmem:[#allocation2 + $0x1d] sm:$0xff]
        %v996 = vld [vmem:[#allocation2 + $0x25] sm:$0xff]
        %v997 = vld [vmem:[#allocation2 + $0x2d] sm:$0xff]
        %v998 = vld [vmem:[#allocation2 + $0x35] sm:$0xff]
        %v999 = vld [vmem:[#allocation2 + $0x3d] sm:$0xff]
        %v1001 = vlaneseq
        %v1002 = vshrl.u32 %v1001, 7
        %v1003 = vsub.s32 0, %v1002
        %v1004 = vrot.slane %v985, %v1003
        %v1006 = vmul.f32 %v992, %v1004
        %v1007 = vmul.f32 %v993, %v1004
        %v1008 = vmul.f32 %v994, %v1004
        %v1009 = vmul.f32 %v995, %v1004
        %v1010 = vmul.f32 %v996, %v1004
        %v1011 = vmul.f32 %v997, %v1004
        %v1012 = vmul.f32 %v998, %v1004
        %v1013 = vmul.f32 %v999, %v1004
        %v1014 = vld [vmem:[#allocation2 + $0x6] sm:$0xff]
        %v1015 = vld [vmem:[#allocation2 + $0xe] sm:$0xff]
        %v1016 = vld [vmem:[#allocation2 + $0x16] sm:$0xff]
        %v1017 = vld [vmem:[#allocation2 + $0x1e] sm:$0xff]
        %v1018 = vld [vmem:[#allocation2 + $0x26] sm:$0xff]
        %v1019 = vld [vmem:[#allocation2 + $0x2e] sm:$0xff]
        %v1020 = vld [vmem:[#allocation2 + $0x36] sm:$0xff]
        %v1021 = vld [vmem:[#allocation2 + $0x3e] sm:$0xff]
        %v1023 = vlaneseq
        %v1024 = vshrl.u32 %v1023, 7
        %v1025 = vsub.s32 0, %v1024
        %v1026 = vrot.slane %v986, %v1025
        %v1028 = vmul.f32 %v1014, %v1026
        %v1029 = vmul.f32 %v1015, %v1026
        %v1030 = vmul.f32 %v1016, %v1026
        %v1031 = vmul.f32 %v1017, %v1026
        %v1032 = vmul.f32 %v1018, %v1026
        %v1033 = vmul.f32 %v1019, %v1026
        %v1034 = vmul.f32 %v1020, %v1026
        %v1035 = vmul.f32 %v1021, %v1026
        %v1036 = vadd.f32 %v1006, %v1028
        %v1037 = vadd.f32 %v1007, %v1029
        %v1038 = vadd.f32 %v1008, %v1030
        %v1039 = vadd.f32 %v1009, %v1031
        %v1040 = vadd.f32 %v1010, %v1032
        %v1041 = vadd.f32 %v1011, %v1033
        %v1042 = vadd.f32 %v1012, %v1034
        %v1043 = vadd.f32 %v1013, %v1035
        %v1044 = vld [vmem:[#allocation2 + $0x7] sm:$0xff]
        %v1045 = vld [vmem:[#allocation2 + $0xf] sm:$0xff]
        %v1046 = vld [vmem:[#allocation2 + $0x17] sm:$0xff]
        %v1047 = vld [vmem:[#allocation2 + $0x1f] sm:$0xff]
        %v1048 = vld [vmem:[#allocation2 + $0x27] sm:$0xff]
        %v1049 = vld [vmem:[#allocation2 + $0x2f] sm:$0xff]
        %v1050 = vld [vmem:[#allocation2 + $0x37] sm:$0xff]
        %v1051 = vld [vmem:[#allocation2 + $0x3f] sm:$0xff]
        %v1053 = vlaneseq
        %v1054 = vshrl.u32 %v1053, 7
        %v1055 = vsub.s32 0, %v1054
        %v1056 = vrot.slane %v987, %v1055
        %v1058 = vmul.f32 %v1044, %v1056
        %v1059 = vmul.f32 %v1045, %v1056
        %v1060 = vmul.f32 %v1046, %v1056
        %v1061 = vmul.f32 %v1047, %v1056
        %v1062 = vmul.f32 %v1048, %v1056
        %v1063 = vmul.f32 %v1049, %v1056
        %v1064 = vmul.f32 %v1050, %v1056
        %v1065 = vmul.f32 %v1051, %v1056
        %v1066 = vadd.f32 %v1036, %v1058
        %v1067 = vadd.f32 %v1037, %v1059
        %v1068 = vadd.f32 %v1038, %v1060
        %v1069 = vadd.f32 %v1039, %v1061
        %v1070 = vadd.f32 %v1040, %v1062
        %v1071 = vadd.f32 %v1041, %v1063
        %v1072 = vadd.f32 %v1042, %v1064
        %v1073 = vadd.f32 %v1043, %v1065
        %v1074 = vld [vmem:[#allocation2 + $0x8] sm:$0xff]
        %v1075 = vld [vmem:[#allocation2 + $0x10] sm:$0xff]
        %v1076 = vld [vmem:[#allocation2 + $0x18] sm:$0xff]
        %v1077 = vld [vmem:[#allocation2 + $0x20] sm:$0xff]
        %v1078 = vld [vmem:[#allocation2 + $0x28] sm:$0xff]
        %v1079 = vld [vmem:[#allocation2 + $0x30] sm:$0xff]
        %v1080 = vld [vmem:[#allocation2 + $0x38] sm:$0xff]
        %v1081 = vld [vmem:[#allocation2 + $0x40] sm:$0xff]
        %v1083 = vlaneseq
        %v1084 = vshrl.u32 %v1083, 7
        %v1085 = vsub.s32 0, %v1084
        %v1086 = vrot.slane %v988, %v1085
        %v1088 = vmul.f32 %v1074, %v1086
        %v1089 = vmul.f32 %v1075, %v1086
        %v1090 = vmul.f32 %v1076, %v1086
        %v1091 = vmul.f32 %v1077, %v1086
        %v1092 = vmul.f32 %v1078, %v1086
        %v1093 = vmul.f32 %v1079, %v1086
        %v1094 = vmul.f32 %v1080, %v1086
        %v1095 = vmul.f32 %v1081, %v1086
        %v1096 = vadd.f32 %v1066, %v1088
        %v1097 = vadd.f32 %v1067, %v1089
        %v1098 = vadd.f32 %v1068, %v1090
        %v1099 = vadd.f32 %v1069, %v1091
        %v1100 = vadd.f32 %v1070, %v1092
        %v1101 = vadd.f32 %v1071, %v1093
        %v1102 = vadd.f32 %v1072, %v1094
        %v1103 = vadd.f32 %v1073, %v1095
        %v1104 = vld [vmem:[#allocation2 + $0x9] sm:$0xff]
        %v1105 = vld [vmem:[#allocation2 + $0x11] sm:$0xff]
        %v1106 = vld [vmem:[#allocation2 + $0x19] sm:$0xff]
        %v1107 = vld [vmem:[#allocation2 + $0x21] sm:$0xff]
        %v1108 = vld [vmem:[#allocation2 + $0x29] sm:$0xff]
        %v1109 = vld [vmem:[#allocation2 + $0x31] sm:$0xff]
        %v1110 = vld [vmem:[#allocation2 + $0x39] sm:$0xff]
        %v1111 = vld [vmem:[#allocation2 + $0x41] sm:$0xff]
        %v1113 = vlaneseq
        %v1114 = vshrl.u32 %v1113, 7
        %v1115 = vsub.s32 0, %v1114
        %v1116 = vrot.slane %v989, %v1115
        %v1118 = vmul.f32 %v1104, %v1116
        %v1119 = vmul.f32 %v1105, %v1116
        %v1120 = vmul.f32 %v1106, %v1116
        %v1121 = vmul.f32 %v1107, %v1116
        %v1122 = vmul.f32 %v1108, %v1116
        %v1123 = vmul.f32 %v1109, %v1116
        %v1124 = vmul.f32 %v1110, %v1116
        %v1125 = vmul.f32 %v1111, %v1116
        %v1126 = vadd.f32 %v1096, %v1118
        %v1127 = vadd.f32 %v1097, %v1119
        %v1128 = vadd.f32 %v1098, %v1120
        %v1129 = vadd.f32 %v1099, %v1121
        %v1130 = vadd.f32 %v1100, %v1122
        %v1131 = vadd.f32 %v1101, %v1123
        %v1132 = vadd.f32 %v1102, %v1124
        %v1133 = vadd.f32 %v1103, %v1125
        %v1134 = vld [vmem:[#allocation2 + $0xa] sm:$0xff]
        %v1135 = vld [vmem:[#allocation2 + $0x12] sm:$0xff]
        %v1136 = vld [vmem:[#allocation2 + $0x1a] sm:$0xff]
        %v1137 = vld [vmem:[#allocation2 + $0x22] sm:$0xff]
        %v1138 = vld [vmem:[#allocation2 + $0x2a] sm:$0xff]
        %v1139 = vld [vmem:[#allocation2 + $0x32] sm:$0xff]
        %v1140 = vld [vmem:[#allocation2 + $0x3a] sm:$0xff]
        %v1141 = vld [vmem:[#allocation2 + $0x42] sm:$0xff]
        %v1143 = vlaneseq
        %v1144 = vshrl.u32 %v1143, 7
        %v1145 = vsub.s32 0, %v1144
        %v1146 = vrot.slane %v990, %v1145
        %v1148 = vmul.f32 %v1134, %v1146
        %v1149 = vmul.f32 %v1135, %v1146
        %v1150 = vmul.f32 %v1136, %v1146
        %v1151 = vmul.f32 %v1137, %v1146
        %v1152 = vmul.f32 %v1138, %v1146
        %v1153 = vmul.f32 %v1139, %v1146
        %v1154 = vmul.f32 %v1140, %v1146
        %v1155 = vmul.f32 %v1141, %v1146
        %v1156 = vadd.f32 %v1126, %v1148
        %v1157 = vadd.f32 %v1127, %v1149
        %v1158 = vadd.f32 %v1128, %v1150
        %v1159 = vadd.f32 %v1129, %v1151
        %v1160 = vadd.f32 %v1130, %v1152
        %v1161 = vadd.f32 %v1131, %v1153
        %v1162 = vadd.f32 %v1132, %v1154
        %v1163 = vadd.f32 %v1133, %v1155
        %v1164 = vld [vmem:[#allocation2 + $0xb] sm:$0xff]
        %v1165 = vld [vmem:[#allocation2 + $0x13] sm:$0xff]
        %v1166 = vld [vmem:[#allocation2 + $0x1b] sm:$0xff]
        %v1167 = vld [vmem:[#allocation2 + $0x23] sm:$0xff]
        %v1168 = vld [vmem:[#allocation2 + $0x2b] sm:$0xff]
        %v1169 = vld [vmem:[#allocation2 + $0x33] sm:$0xff]
        %v1170 = vld [vmem:[#allocation2 + $0x3b] sm:$0xff]
        %v1171 = vld [vmem:[#allocation2 + $0x43] sm:$0xff]
        %v1173 = vlaneseq
        %v1174 = vshrl.u32 %v1173, 7
        %v1175 = vsub.s32 0, %v1174
        %v1176 = vrot.slane %v991, %v1175
        %v1178 = vmul.f32 %v1164, %v1176
        %v1179 = vmul.f32 %v1165, %v1176
        %v1180 = vmul.f32 %v1166, %v1176
        %v1181 = vmul.f32 %v1167, %v1176
        %v1182 = vmul.f32 %v1168, %v1176
        %v1183 = vmul.f32 %v1169, %v1176
        %v1184 = vmul.f32 %v1170, %v1176
        %v1185 = vmul.f32 %v1171, %v1176
        %v1186 = vadd.f32 %v1156, %v1178
        %v1187 = vadd.f32 %v1157, %v1179
        %v1188 = vadd.f32 %v1158, %v1180
        %v1189 = vadd.f32 %v1159, %v1181
        %v1190 = vadd.f32 %v1160, %v1182
        %v1191 = vadd.f32 %v1161, %v1183
        %v1192 = vadd.f32 %v1162, %v1184
        %v1193 = vadd.f32 %v1163, %v1185
        %v1194 = vpack.c.bf16 %v1187, %v1186
        %v1195 = vpack.c.bf16 %v1189, %v1188
        %v1196 = vpack.c.bf16 %v1191, %v1190
        %v1197 = vpack.c.bf16 %v1193, %v1192
        %v1202 = vunpack.c.l.b16 %v1194
        %v1203 = vunpack.c.h.b16 %v1194
        %v1204 = vunpack.c.l.b16 %v1195
        %v1205 = vunpack.c.h.b16 %v1195
        %v1206 = vunpack.c.l.b16 %v1196
        %v1207 = vunpack.c.h.b16 %v1196
        %v1208 = vunpack.c.l.b16 %v1197
        %v1209 = vunpack.c.h.b16 %v1197
        %v1210 = vpack.c.b16 %v1202, %v1202
        %v1211 = vpack.c.b16 %v1203, %v1203
        %v1212 = vpack.c.b16 %v1204, %v1204
        %v1213 = vpack.c.b16 %v1205, %v1205
        %v1214 = vpack.c.b16 %v1206, %v1206
        %v1215 = vpack.c.b16 %v1207, %v1207
        %v1216 = vpack.c.b16 %v1208, %v1208
        %v1217 = vpack.c.b16 %v1209, %v1209
        %vm1226 = vcmask 257024
        %1227 = vst.msk [vmem:[%s474] sm:$0xf] %vm1226, %v1210
        %1228 = vst.msk [vmem:[%s474 + $0x4] sm:$0xf] %vm1226, %v1211
        %1229 = vst.msk [vmem:[%s474 + $0x8] sm:$0xf] %vm1226, %v1212
        %1230 = vst.msk [vmem:[%s474 + $0xc] sm:$0xf] %vm1226, %v1213
        %1231 = vst.msk [vmem:[%s474 + $0x10] sm:$0xf] %vm1226, %v1214
        %1232 = vst.msk [vmem:[%s474 + $0x14] sm:$0xf] %vm1226, %v1215
        %1233 = vst.msk [vmem:[%s474 + $0x18] sm:$0xf] %vm1226, %v1216
        %1234 = vst.msk [vmem:[%s474 + $0x1c] sm:$0xf] %vm1226, %v1217
        %v1235 = vsel %vm604, %v1186, 0.0
        %v1236 = vsel %vm604, %v1187, 0.0
        %v1237 = vadd.f32 %v1235, %v1236
        %v1238 = vsel %vm604, %v1188, 0.0
        %v1239 = vadd.f32 %v1237, %v1238
        %v1240 = vsel %vm604, %v1189, 0.0
        %v1241 = vadd.f32 %v1239, %v1240
        %v1242 = vsel %vm604, %v1190, 0.0
        %v1243 = vadd.f32 %v1241, %v1242
        %v1244 = vsel %vm604, %v1191, 0.0
        %v1245 = vadd.f32 %v1243, %v1244
        %v1246 = vsel %vm604, %v1192, 0.0
        %v1247 = vadd.f32 %v1245, %v1246
        %v1248 = vsel %vm604, %v1193, 0.0
        %v1249 = vadd.f32 %v1247, %v1248
        %v1250 = vrot.slane %v1249, 4
        %v1251 = vadd.f32 %v1249, %v1250
        %v1252 = vrot.slane %v1251, 2
        %v1253 = vadd.f32 %v1251, %v1252
        %v1254 = vrot.slane %v1253, 1
        %v1255 = vadd.f32 %v1253, %v1254
        %vm1256 = vcmask 253952
        %1257 = vst.msk [vmem:[%s423] sm:$0x1] %vm1256, %v1255
        %v1258 = vmul.f32 %v1186, %v1186
        %v1259 = vmul.f32 %v1187, %v1187
        %v1260 = vmul.f32 %v1188, %v1188
        %v1261 = vmul.f32 %v1189, %v1189
        %v1262 = vmul.f32 %v1190, %v1190
        %v1263 = vmul.f32 %v1191, %v1191
        %v1264 = vmul.f32 %v1192, %v1192
        %v1265 = vmul.f32 %v1193, %v1193
        %v1266 = vsel %vm604, %v1258, 0.0
        %v1267 = vsel %vm604, %v1259, 0.0
        %v1268 = vadd.f32 %v1266, %v1267
        %v1269 = vsel %vm604, %v1260, 0.0
        %v1270 = vadd.f32 %v1268, %v1269
        %v1271 = vsel %vm604, %v1261, 0.0
        %v1272 = vadd.f32 %v1270, %v1271
        %v1273 = vsel %vm604, %v1262, 0.0
        %v1274 = vadd.f32 %v1272, %v1273
        %v1275 = vsel %vm604, %v1263, 0.0
        %v1276 = vadd.f32 %v1274, %v1275
        %v1277 = vsel %vm604, %v1264, 0.0
        %v1278 = vadd.f32 %v1276, %v1277
        %v1279 = vsel %vm604, %v1265, 0.0
        %v1280 = vadd.f32 %v1278, %v1279
        %v1281 = vrot.slane %v1280, 4
        %v1282 = vadd.f32 %v1280, %v1281
        %v1283 = vrot.slane %v1282, 2
        %v1284 = vadd.f32 %v1282, %v1283
        %v1285 = vrot.slane %v1284, 1
        %v1286 = vadd.f32 %v1284, %v1285
        %1287 = vst.msk [vmem:[%s423 + $0x1] sm:$0x1] %vm1256, %v1286
        %s1288 = smul.u32 8, %s28
        %p1289 = scmp.lt.s32.totalorder %s27, 1
        %s1290 = scalar_select %p1289, %s27, 1
        %p1291 = scmp.lt.s32.totalorder %s1288, 15
        %s1292 = scalar_select %p1291, %s1288, 15
        %s1293 = smul.addr %s1290, 16
        %s1294 = sadd.s32 %s1292, %s1293
        %s1295 = smul.addr %s1294, 4
        %s1296 = scalar_lea.vmem %s7, %s1295
        %s1297 = sand.u32 %s257, 1
        %s1298 = scalar_lea.sflag [#allocation4], %s1297
        %s1299 = sand.u32 %s257, 1
        %s1300 = smul.addr %s1299, 2
        %s1301 = scalar_lea.vmem [#allocation3], %s1300
        // Predicated region
        $region49: #{tpu_custom_call.1} parent=47 // pred_check
          %p1302 = pneg %p239
        $region50: #{tpu_custom_call.1} parent=47 // pred_check_branch
          %1304 = sbr.rel (%p1302) target = $region52
        $region51: #{tpu_custom_call.1} parent=47 // pred_region
          %s1305 = smul.u32 8, %s28
        $region52: #{tpu_custom_call.1} parent=47 // pred_fallthru
          _
        // Predicated region
        $region53: #{tpu_custom_call.1} parent=47 // pred_check
          %p1306 = pneg %p267
        $region54: #{tpu_custom_call.1} parent=47 // pred_check_branch
          %1308 = sbr.rel (%p1306) target = $region56
        $region55: #{tpu_custom_call.1} parent=47 // pred_region
          %s1310 = ssub.s32 32, 32
          %1311 = vsyncadd %s1298, %s1310
          %s1312 = smul.addr %s27, 2
          %s1313 = sadd.s32 %s28, %s1312
          %s1314 = smul.addr %s1313, 32
          %s1315 = scalar_lea.hbm %s8, %s1314
          %s1317 = sshll.u32 %s1301, 4
          %s1318 = int_to_ptr.vmem [resolvable:$true] %s1317
          %1320 = dma.vmem_to_hbm [thread:$0]  %s1318, 32, %s1315, %s1298
        $region56: #{tpu_custom_call.1} parent=47 // pred_fallthru
          _
      $region48: #{tpu_custom_call.1} parent=5 // pred_fallthru
        _
      %p1321 = scmp.le.s32.totalorder 2, %s18
      // Predicated region
      $region57: #{tpu_custom_call.1} parent=5 // pred_check
        %p1322 = pneg %p1321
      $region58: #{tpu_custom_call.1} parent=5 // pred_check_branch
        %1324 = sbr.rel (%p1322) target = $region60
      $region59: #{tpu_custom_call.1} parent=5 // pred_region
        %s1325 = ssub.s32 %s18, 2
        // Predicated region
        $region61: #{tpu_custom_call.1} parent=59 // pred_check
          %p1326 = pneg %p245
        $region62: #{tpu_custom_call.1} parent=59 // pred_check_branch
          %1328 = sbr.rel (%p1326) target = $region64
        $region63: #{tpu_custom_call.1} parent=59 // pred_region
          %s1329 = smul.u32 8, %s30
          %p1330 = scmp.lt.s32.totalorder %s29, 1
          %s1331 = scalar_select %p1330, %s29, 1
          %p1332 = scmp.lt.s32.totalorder %s1329, 15
          %s1333 = scalar_select %p1332, %s1329, 15
          %s1334 = smul.addr %s1331, 16
          %s1335 = sadd.s32 %s1333, %s1334
          %s1336 = smul.addr %s1335, 4
          %s1337 = scalar_lea.vmem %s7, %s1336
        $region64: #{tpu_custom_call.1} parent=59 // pred_fallthru
          _
        // Predicated region
        $region65: #{tpu_custom_call.1} parent=59 // pred_check
          %p1338 = pneg %p273
        $region66: #{tpu_custom_call.1} parent=59 // pred_check_branch
          %1340 = sbr.rel (%p1338) target = $region68
        $region67: #{tpu_custom_call.1} parent=59 // pred_region
          %s1341 = sand.u32 %s258, 1
          %s1342 = scalar_lea.sflag [#allocation4], %s1341
          %s1343 = sand.u32 %s258, 1
          %s1344 = smul.addr %s1343, 2
          %s1345 = scalar_lea.vmem [#allocation3], %s1344
          %1346 = dma.done %s1342, 32
        $region68: #{tpu_custom_call.1} parent=59 // pred_fallthru
          _
      $region60: #{tpu_custom_call.1} parent=5 // pred_fallthru
        _
    $region6: #{tpu_custom_call.1} parent=1 // loop_footer
      %s22 = sadd.s32 1, %s18
    $region7: #{tpu_custom_call.1} parent=1 // loop_footer_branch
      %17 = sbr.rel target = $region3
    $region8: #{tpu_custom_call.1} parent=1 // loop_exit
      _
    %1347 = vsyncpa [#allocation4], 1
    %s1348 = scalar_lea.sflag [#allocation4], 1
    %1349 = vsyncpa %s1348, 1

</llo_original>
